<compile_context>
chip_gen: v5e
topology: v5e:2x2
jax: 0.10.0
libtpu: 0.0.40
codegen_flags: <defaults>
</compile_context>

<pallas_src>
import functools
import math

import jax
import jax.numpy as jnp
from jax.experimental import pallas as pl
from jax.experimental.pallas import tpu as pltpu

KH = 7          # conv kernel height (along sequence L)
PAD = 3         # "same" padding along L
F_IN = 1024     # input feature channels
HID = 32        # hidden channels
NCLS = 20       # output classes
HALO = 2 * PAD  # rows of x needed beyond a tile on each side (conv1+conv2)

TL_MAX = 2048   # max L-tile: bf16 x -> 4 MiB main block (8 MiB double-buffered)


def cnn_kernel(xm_ref, xl_ref, xr_ref, w1c_ref, b1_ref, w2c_ref, b2_ref,
               o_ref, *, seq_len):
    # xm_ref : (1, TL, 1024) bf16  main x tile (global rows [t*TL, (t+1)*TL))
    # xl_ref : (1, 8, 1024)  bf16  8-row block holding the 6-row LEFT halo
    # xr_ref : (1, 8, 1024)  bf16  8-row block holding the 6-row RIGHT halo
    # w1c_ref: (1024, 7*32)  bf16  conv1 taps concatenated along N
    # b1_ref : (1, 32)  f32
    # w2c_ref: (32, 7*20)    bf16  conv2 taps concatenated along N
    # b2_ref : (1, 20)  f32
    # o_ref  : (1, 20, TL)   f32   output tile, channels-first (lane-dense in L)
    TL = xm_ref.shape[1]
    TLH = TL + 2 * PAD                 # hidden rows needed to cover this tile

    t = pl.program_id(1)
    row0 = t * TL                      # global x row of the first main-tile row

    xm = xm_ref[0]                     # (TL, 1024)
    xl = xl_ref[0, 8 - HALO:8, :]      # (6, 1024)  global rows row0-6 .. row0-1
    xr = xr_ref[0, 0:HALO, :]          # (6, 1024)  global rows row0+TL .. +TL+5
    w1c = w1c_ref[...]                 # (1024, 224)

    # ---- conv1 as ONE wide matmul per region (f32 accumulation) ----------
    y_main = jnp.dot(xm, w1c, preferred_element_type=jnp.float32)   # (TL, 224)
    y_left = jnp.dot(xl, w1c, preferred_element_type=jnp.float32)   # (6, 224)
    y_right = jnp.dot(xr, w1c, preferred_element_type=jnp.float32)  # (6, 224)

    # conv1 zero padding along the sequence: x rows outside [0, seq_len)
    # contribute zero.  Boundary / ragged edge blocks may hold garbage rows,
    # which these masks also neutralize.
    y_left = jnp.where(t > 0, y_left, 0.0)
    jr = jax.lax.broadcasted_iota(jnp.int32, (HALO, 1), 0)
    y_right = jnp.where(row0 + TL + jr < seq_len, y_right, 0.0)
    if seq_len % TL != 0:              # only a ragged last tile needs this
        jm = jax.lax.broadcasted_iota(jnp.int32, (TL, 1), 0)
        y_main = jnp.where(row0 + jm < seq_len, y_main, 0.0)

    # ---- tap combine, no concatenated y_ext intermediate -----------------
    # acc1 row i  <->  pre-ReLU hidden row  g = row0 - 3 + i,  i in [0, TL+6).
    # Tap k needs y rows [k-6, k+TL) in main-tile coordinates: 6-k rows from
    # the left halo, all TL rows of y_main, and k rows from the right halo.
    def tap(k):
        cols = slice(k * HID, (k + 1) * HID)
        parts = []
        if k < KH - 1:
            parts.append(y_left[k:HALO, cols])        # 6-k rows
        parts.append(y_main[:, cols])                 # TL rows
        if k > 0:
            parts.append(y_right[0:k, cols])          # k rows
        return jnp.concatenate(parts, axis=0)         # (TL+6, 32)

    acc1 = tap(0)
    for k in range(1, KH):
        acc1 = acc1 + tap(k)

    h = jnp.maximum(acc1 + b1_ref[...], 0.0)          # (TL+6, 32) f32
    # Dropout(p=0.0) is the identity in train and eval -> nothing to do.

    # conv2 zero padding: hidden rows outside [0, seq_len) must be exact zeros.
    ih = jax.lax.broadcasted_iota(jnp.int32, (TLH, 1), 0)
    g = row0 - PAD + ih
    h = jnp.where(jnp.logical_and(g >= 0, g < seq_len), h, 0.0)

    # ---- conv2 as ONE bf16 matmul + tap combine ---------------------------
    z = jnp.dot(h.astype(jnp.bfloat16), w2c_ref[...],
                preferred_element_type=jnp.float32)   # (TL+6, 140)
    acc2 = z[0:TL, 0:NCLS]
    for k in range(1, KH):
        acc2 = acc2 + z[k:k + TL, k * NCLS:(k + 1) * NCLS]
    out = acc2 + b2_ref[...]                          # (TL, 20)

    # Write channels-first directly: (20, TL), lane-dense along L.
    o_ref[0] = jnp.transpose(out, (1, 0))


def _round_up(v, m):
    return ((v + m - 1) // m) * m


def _pick_tile(batch, L):
    """Choose the L-tile size.  Multi-tile TLs are multiples of 128 (lane-
    dense output blocks, 8-row-aligned halo indexing); the last tile may be
    ragged and is masked in-kernel.  Batch-1 mid/long sequences are split
    into >= 2 tiles so both v7x TensorCores get a grid step."""
    if L <= 256 or (batch > 1 and L <= TL_MAX):
        return L                               # single whole-L tile per row
    if batch == 1:
        return min(TL_MAX, _round_up(pl.cdiv(L, 2), 128))
    return TL_MAX


def cnn_forward(x, w1, b1, w2, b2):
    """x: (B, L, 1024) bf16 (preferred) or f32  ->  (B, 20, L) float32.

    Pass bf16 x so the cast fuses into the upstream producer -- the kernel is
    HBM-read bound on x, so bf16 halves the dominant DMA stream."""
    B, L, F = x.shape
    assert F == F_IN, F
    assert L >= 8, "sequence length must be at least 8"
    if x.dtype != jnp.bfloat16:
        x = x.astype(jnp.bfloat16)

    TL = _pick_tile(B, L)
    NT = pl.cdiv(L, TL)
    HB = TL // 8                       # 8-row halo blocks per tile
    LAST_HB = pl.cdiv(L, 8) - 1        # last valid 8-row block index

    # Fold the 7 taps into the matmul N dimension (precomputed once; tiny).
    w1c = jnp.transpose(w1, (1, 0, 2)).reshape(F_IN, KH * HID).astype(jnp.bfloat16)
    w2c = jnp.transpose(w2, (1, 0, 2)).reshape(HID, KH * NCLS).astype(jnp.bfloat16)
    b1r = b1.reshape(1, HID).astype(jnp.float32)
    b2r = b2.reshape(1, NCLS).astype(jnp.float32)

    # 6-row halos live in the adjacent 8-row x blocks.  Indices are clamped at
    # the global boundaries; the corresponding contributions are masked
    # in-kernel, so only index validity matters here.
    left_map = lambda b, t: (b, jnp.maximum(t * HB - 1, 0), 0)
    right_map = lambda b, t: (b, jnp.minimum((t + 1) * HB, LAST_HB), 0)

    kernel = functools.partial(cnn_kernel, seq_len=L)
    return pl.pallas_call(
        kernel,
        out_shape=jax.ShapeDtypeStruct((B, NCLS, L), jnp.float32),
        grid_spec=pltpu.PrefetchScalarGridSpec(
            num_scalar_prefetch=0,
            grid=(B, NT),
            in_specs=[
                pl.BlockSpec((1, TL, F_IN), lambda b, t: (b, t, 0)),   # main x
                pl.BlockSpec((1, 8, F_IN), left_map),                  # left halo
                pl.BlockSpec((1, 8, F_IN), right_map),                 # right halo
                pl.BlockSpec((F_IN, KH * HID), lambda b, t: (0, 0)),   # w1 folded
                pl.BlockSpec((1, HID), lambda b, t: (0, 0)),           # b1
                pl.BlockSpec((HID, KH * NCLS), lambda b, t: (0, 0)),   # w2 folded
                pl.BlockSpec((1, NCLS), lambda b, t: (0, 0)),          # b2
            ],
            out_specs=pl.BlockSpec((1, NCLS, TL), lambda b, t: (b, 0, t)),
        ),
        compiler_params=pltpu.CompilerParams(
            dimension_semantics=("parallel", "parallel"),
            vmem_limit_bytes=48 * 1024 * 1024),
    )(x, x, x, w1c, b1r, w2c, b2r)


def ref_forward(x, w1, b1, w2, b2):
    """Pure-JAX reference using XLA conv, mirroring the PyTorch module."""
    xc = jnp.transpose(x, (0, 2, 1))[..., None]              # (B, 1024, L, 1)
    w1_oihw = jnp.transpose(w1, (2, 1, 0))[..., None]        # (32, 1024, 7, 1)
    h = jax.lax.conv_general_dilated(
        xc, w1_oihw, (1, 1), ((PAD, PAD), (0, 0)),
        dimension_numbers=("NCHW", "OIHW", "NCHW")) + b1[None, :, None, None]
    h = jnp.maximum(h, 0.0)
    w2_oihw = jnp.transpose(w2, (2, 1, 0))[..., None]        # (20, 32, 7, 1)
    y = jax.lax.conv_general_dilated(
        h, w2_oihw, (1, 1), ((PAD, PAD), (0, 0)),
        dimension_numbers=("NCHW", "OIHW", "NCHW")) + b2[None, :, None, None]
    return y[..., 0]                                          # (B, 20, L)


if __name__ == "__main__":
    key = jax.random.PRNGKey(0)
    kx1, k1, k2, k3, k4, kx2 = jax.random.split(key, 6)

    # Deterministic PyTorch-style uniform init (bound = 1/sqrt(fan_in)).
    bound1 = 1.0 / math.sqrt(F_IN * KH)
    w1 = jax.random.uniform(k1, (KH, F_IN, HID), jnp.float32, -bound1, bound1)
    b1 = jax.random.uniform(k2, (HID,), jnp.float32, -bound1, bound1)
    bound2 = 1.0 / math.sqrt(HID * KH)
    w2 = jax.random.uniform(k3, (KH, HID, NCLS), jnp.float32, -bound2, bound2)
    b2 = jax.random.uniform(k4, (NCLS,), jnp.float32, -bound2, bound2)

    # Case 1: small batch, short sequence (single L-tile per batch row).
    B1, L1 = 2, 16
    x1 = jax.random.normal(kx1, (B1, L1, F_IN), jnp.float32)
    y1 = jax.block_until_ready(cnn_forward(x1.astype(jnp.bfloat16), w1, b1, w2, b2))
    assert y1.shape == (B1, NCLS, L1), y1.shape
    y1_ref = jax.block_until_ready(ref_forward(x1, w1, b1, w2, b2))
    err1 = float(jnp.max(jnp.abs(y1 - y1_ref)))
    assert err1 < 2e-2, f"case1 max abs error too large: {err1}"

    # Case 2: batch-1 ragged sequence (exercises multi-tile halos, in-kernel
    # ragged-L masking, and the v7x two-tile split).
    B2, L2 = 1, 300
    x2 = jax.random.normal(kx2, (B2, L2, F_IN), jnp.float32)
    y2 = jax.block_until_ready(cnn_forward(x2.astype(jnp.bfloat16), w1, b1, w2, b2))
    assert y2.shape == (B2, NCLS, L2), y2.shape
    y2_ref = jax.block_until_ready(ref_forward(x2, w1, b1, w2, b2))
    err2 = float(jnp.max(jnp.abs(y2 - y2_ref)))
    assert err2 < 2e-2, f"case2 max abs error too large: {err2}"

    print("KERNEL_OK")
</pallas_src>

<mosaic_0001>
module attributes {stable_mosaic.version = 11 : i64} {
  func.func @cnn_kernel(%arg0: i32, %arg1: i32, %arg2: memref<1x16x1024xbf16, #tpu.memory_space<vmem>>, %arg3: memref<1x8x1024xbf16, #tpu.memory_space<vmem>>, %arg4: memref<1x8x1024xbf16, #tpu.memory_space<vmem>>, %arg5: memref<1024x224xbf16, #tpu.memory_space<vmem>>, %arg6: memref<1x32xf32, #tpu.memory_space<vmem>>, %arg7: memref<32x140xbf16, #tpu.memory_space<vmem>>, %arg8: memref<1x20xf32, #tpu.memory_space<vmem>>, %arg9: memref<1x20x16xf32, #tpu.memory_space<vmem>>) attributes {dimension_semantics = [#tpu.dimension_semantics<parallel>, #tpu.dimension_semantics<parallel>], iteration_bounds = array<i64: 2, 1>, scalar_prefetch = 0 : i64, scratch_operands = 0 : i64, tpu.core_type = #tpu.core_type<tc>, window_params = [{transform_indices = @transform_0, window_bounds = array<i64: 1, 16, 1024>}, {transform_indices = @transform_1, window_bounds = array<i64: 1, 8, 1024>}, {transform_indices = @transform_2, window_bounds = array<i64: 1, 8, 1024>}, {pipeline_mode = #tpu.pipeline_mode<synchronous>, transform_indices = @transform_3, window_bounds = array<i64: 1024, 224>}, {pipeline_mode = #tpu.pipeline_mode<synchronous>, transform_indices = @transform_4, window_bounds = array<i64: 1, 32>}, {pipeline_mode = #tpu.pipeline_mode<synchronous>, transform_indices = @transform_5, window_bounds = array<i64: 32, 140>}, {pipeline_mode = #tpu.pipeline_mode<synchronous>, transform_indices = @transform_6, window_bounds = array<i64: 1, 20>}, {transform_indices = @transform_7, window_bounds = array<i64: 1, 20, 16>}]} {
    %c16_i32 = arith.constant 16 : i32
    %0 = arith.muli %arg1, %c16_i32 : i32
    %c0 = arith.constant 0 : index
    %c0_0 = arith.constant 0 : index
    %c0_1 = arith.constant 0 : index
    %1 = vector.load %arg2[%c0, %c0_0, %c0_1] : memref<1x16x1024xbf16, #tpu.memory_space<vmem>>, vector<1x16x1024xbf16>
    %2 = vector.shape_cast %1 : vector<1x16x1024xbf16> to vector<16x1024xbf16>
    %c0_2 = arith.constant 0 : index
    %c2 = arith.constant 2 : index
    %c0_3 = arith.constant 0 : index
    %3 = vector.load %arg3[%c0_2, %c2, %c0_3] : memref<1x8x1024xbf16, #tpu.memory_space<vmem>>, vector<1x6x1024xbf16>
    %4 = vector.shape_cast %3 : vector<1x6x1024xbf16> to vector<6x1024xbf16>
    %c0_4 = arith.constant 0 : index
    %c0_5 = arith.constant 0 : index
    %c0_6 = arith.constant 0 : index
    %5 = vector.load %arg4[%c0_4, %c0_5, %c0_6] : memref<1x8x1024xbf16, #tpu.memory_space<vmem>>, vector<1x6x1024xbf16>
    %6 = vector.shape_cast %5 : vector<1x6x1024xbf16> to vector<6x1024xbf16>
    %c0_7 = arith.constant 0 : index
    %c0_8 = arith.constant 0 : index
    %7 = vector.load %arg5[%c0_7, %c0_8] : memref<1024x224xbf16, #tpu.memory_space<vmem>>, vector<1024x224xbf16>
    %cst = arith.constant dense<0.000000e+00> : vector<16x224xf32>
    %8 = tpu.matmul %2, %7, %cst {dimension_numbers = #tpu.dot_dimension_numbers<[1], [0], [0], [1], [0, 0, 1, 1], [], []>} : vector<16x1024xbf16>, vector<1024x224xbf16>, vector<16x224xf32> -> vector<16x224xf32>
    %cst_9 = arith.constant dense<0.000000e+00> : vector<6x224xf32>
    %9 = tpu.matmul %4, %7, %cst_9 {dimension_numbers = #tpu.dot_dimension_numbers<[1], [0], [0], [1], [0, 0, 1, 1], [], []>} : vector<6x1024xbf16>, vector<1024x224xbf16>, vector<6x224xf32> -> vector<6x224xf32>
    %cst_10 = arith.constant dense<0.000000e+00> : vector<6x224xf32>
    %10 = tpu.matmul %6, %7, %cst_10 {dimension_numbers = #tpu.dot_dimension_numbers<[1], [0], [0], [1], [0, 0, 1, 1], [], []>} : vector<6x1024xbf16>, vector<1024x224xbf16>, vector<6x224xf32> -> vector<6x224xf32>
    %c0_i32 = arith.constant 0 : i32
    %11 = arith.cmpi sgt, %arg1, %c0_i32 : i32
    %cst_11 = arith.constant 0.000000e+00 : f32
    %12 = vector.broadcast %cst_11 : f32 to vector<6x224xf32>
    %13 = arith.select %11, %9, %12 : vector<6x224xf32>
    %14 = tpu.iota {dimensions = array<i32: 0>} : vector<6x1xi32>
    %c16_i32_12 = arith.constant 16 : i32
    %15 = arith.addi %0, %c16_i32_12 : i32
    %16 = vector.broadcast %15 : i32 to vector<6x1xi32>
    %17 = arith.addi %16, %14 : vector<6x1xi32>
    %c16_i32_13 = arith.constant 16 : i32
    %18 = vector.broadcast %c16_i32_13 : i32 to vector<6x1xi32>
    %19 = arith.cmpi slt, %17, %18 : vector<6x1xi32>
    %cst_14 = arith.constant 0.000000e+00 : f32
    %20 = vector.shape_cast %19 : vector<6x1xi1> to vector<6x1xi1>
    %21 = vector.broadcast %20 : vector<6x1xi1> to vector<6x224xi1>
    %22 = vector.broadcast %cst_14 : f32 to vector<6x224xf32>
    %23 = arith.select %21, %10, %22 : vector<6x224xi1>, vector<6x224xf32>
    %24 = vector.extract_strided_slice %13 {offsets = [0, 0], sizes = [6, 32], strides = [1, 1]} : vector<6x224xf32> to vector<6x32xf32>
    %25 = vector.extract_strided_slice %8 {offsets = [0, 0], sizes = [16, 32], strides = [1, 1]} : vector<16x224xf32> to vector<16x32xf32>
    %26 = tpu.concatenate %24, %25 in 0 : vector<6x32xf32>, vector<16x32xf32> -> vector<22x32xf32>
    %27 = vector.extract_strided_slice %13 {offsets = [1, 32], sizes = [5, 32], strides = [1, 1]} : vector<6x224xf32> to vector<5x32xf32>
    %28 = vector.extract_strided_slice %8 {offsets = [0, 32], sizes = [16, 32], strides = [1, 1]} : vector<16x224xf32> to vector<16x32xf32>
    %29 = vector.extract_strided_slice %23 {offsets = [0, 32], sizes = [1, 32], strides = [1, 1]} : vector<6x224xf32> to vector<1x32xf32>
    %30 = tpu.concatenate %27, %28, %29 in 0 : vector<5x32xf32>, vector<16x32xf32>, vector<1x32xf32> -> vector<22x32xf32>
    %31 = arith.addf %26, %30 : vector<22x32xf32>
    %32 = vector.extract_strided_slice %13 {offsets = [2, 64], sizes = [4, 32], strides = [1, 1]} : vector<6x224xf32> to vector<4x32xf32>
    %33 = vector.extract_strided_slice %8 {offsets = [0, 64], sizes = [16, 32], strides = [1, 1]} : vector<16x224xf32> to vector<16x32xf32>
    %34 = vector.extract_strided_slice %23 {offsets = [0, 64], sizes = [2, 32], strides = [1, 1]} : vector<6x224xf32> to vector<2x32xf32>
    %35 = tpu.concatenate %32, %33, %34 in 0 : vector<4x32xf32>, vector<16x32xf32>, vector<2x32xf32> -> vector<22x32xf32>
    %36 = arith.addf %31, %35 : vector<22x32xf32>
    %37 = vector.extract_strided_slice %13 {offsets = [3, 96], sizes = [3, 32], strides = [1, 1]} : vector<6x224xf32> to vector<3x32xf32>
    %38 = vector.extract_strided_slice %8 {offsets = [0, 96], sizes = [16, 32], strides = [1, 1]} : vector<16x224xf32> to vector<16x32xf32>
    %39 = vector.extract_strided_slice %23 {offsets = [0, 96], sizes = [3, 32], strides = [1, 1]} : vector<6x224xf32> to vector<3x32xf32>
    %40 = tpu.concatenate %37, %38, %39 in 0 : vector<3x32xf32>, vector<16x32xf32>, vector<3x32xf32> -> vector<22x32xf32>
    %41 = arith.addf %36, %40 : vector<22x32xf32>
    %42 = vector.extract_strided_slice %13 {offsets = [4, 128], sizes = [2, 32], strides = [1, 1]} : vector<6x224xf32> to vector<2x32xf32>
    %43 = vector.extract_strided_slice %8 {offsets = [0, 128], sizes = [16, 32], strides = [1, 1]} : vector<16x224xf32> to vector<16x32xf32>
    %44 = vector.extract_strided_slice %23 {offsets = [0, 128], sizes = [4, 32], strides = [1, 1]} : vector<6x224xf32> to vector<4x32xf32>
    %45 = tpu.concatenate %42, %43, %44 in 0 : vector<2x32xf32>, vector<16x32xf32>, vector<4x32xf32> -> vector<22x32xf32>
    %46 = arith.addf %41, %45 : vector<22x32xf32>
    %47 = vector.extract_strided_slice %13 {offsets = [5, 160], sizes = [1, 32], strides = [1, 1]} : vector<6x224xf32> to vector<1x32xf32>
    %48 = vector.extract_strided_slice %8 {offsets = [0, 160], sizes = [16, 32], strides = [1, 1]} : vector<16x224xf32> to vector<16x32xf32>
    %49 = vector.extract_strided_slice %23 {offsets = [0, 160], sizes = [5, 32], strides = [1, 1]} : vector<6x224xf32> to vector<5x32xf32>
    %50 = tpu.concatenate %47, %48, %49 in 0 : vector<1x32xf32>, vector<16x32xf32>, vector<5x32xf32> -> vector<22x32xf32>
    %51 = arith.addf %46, %50 : vector<22x32xf32>
    %52 = vector.extract_strided_slice %8 {offsets = [0, 192], sizes = [16, 32], strides = [1, 1]} : vector<16x224xf32> to vector<16x32xf32>
    %53 = vector.extract_strided_slice %23 {offsets = [0, 192], sizes = [6, 32], strides = [1, 1]} : vector<6x224xf32> to vector<6x32xf32>
    %54 = tpu.concatenate %52, %53 in 0 : vector<16x32xf32>, vector<6x32xf32> -> vector<22x32xf32>
    %55 = arith.addf %51, %54 : vector<22x32xf32>
    %c0_15 = arith.constant 0 : index
    %c0_16 = arith.constant 0 : index
    %56 = vector.load %arg6[%c0_15, %c0_16] : memref<1x32xf32, #tpu.memory_space<vmem>>, vector<1x32xf32>
    %57 = vector.broadcast %56 : vector<1x32xf32> to vector<22x32xf32>
    %58 = arith.addf %55, %57 : vector<22x32xf32>
    %cst_17 = arith.constant 0.000000e+00 : f32
    %59 = vector.broadcast %cst_17 : f32 to vector<22x32xf32>
    %60 = arith.maximumf %58, %59 : vector<22x32xf32>
    %61 = tpu.iota {dimensions = array<i32: 0>} : vector<22x1xi32>
    %c3_i32 = arith.constant 3 : i32
    %62 = arith.subi %0, %c3_i32 : i32
    %63 = vector.broadcast %62 : i32 to vector<22x1xi32>
    %64 = arith.addi %63, %61 : vector<22x1xi32>
    %c0_i32_18 = arith.constant 0 : i32
    %65 = vector.broadcast %c0_i32_18 : i32 to vector<22x1xi32>
    %66 = arith.cmpi sge, %64, %65 : vector<22x1xi32>
    %c16_i32_19 = arith.constant 16 : i32
    %67 = vector.broadcast %c16_i32_19 : i32 to vector<22x1xi32>
    %68 = arith.cmpi slt, %64, %67 : vector<22x1xi32>
    %69 = arith.andi %66, %68 : vector<22x1xi1>
    %cst_20 = arith.constant 0.000000e+00 : f32
    %70 = vector.shape_cast %69 : vector<22x1xi1> to vector<22x1xi1>
    %71 = vector.broadcast %70 : vector<22x1xi1> to vector<22x32xi1>
    %72 = vector.broadcast %cst_20 : f32 to vector<22x32xf32>
    %73 = arith.select %71, %60, %72 : vector<22x32xi1>, vector<22x32xf32>
    %74 = arith.truncf %73 : vector<22x32xf32> to vector<22x32xbf16>
    %c0_21 = arith.constant 0 : index
    %c0_22 = arith.constant 0 : index
    %75 = vector.load %arg7[%c0_21, %c0_22] : memref<32x140xbf16, #tpu.memory_space<vmem>>, vector<32x140xbf16>
    %cst_23 = arith.constant dense<0.000000e+00> : vector<22x140xf32>
    %76 = tpu.matmul %74, %75, %cst_23 {dimension_numbers = #tpu.dot_dimension_numbers<[1], [0], [0], [1], [0, 0, 1, 1], [], []>} : vector<22x32xbf16>, vector<32x140xbf16>, vector<22x140xf32> -> vector<22x140xf32>
    %77 = vector.extract_strided_slice %76 {offsets = [0, 0], sizes = [16, 20], strides = [1, 1]} : vector<22x140xf32> to vector<16x20xf32>
    %78 = vector.extract_strided_slice %76 {offsets = [1, 20], sizes = [16, 20], strides = [1, 1]} : vector<22x140xf32> to vector<16x20xf32>
    %79 = arith.addf %77, %78 : vector<16x20xf32>
    %80 = vector.extract_strided_slice %76 {offsets = [2, 40], sizes = [16, 20], strides = [1, 1]} : vector<22x140xf32> to vector<16x20xf32>
    %81 = arith.addf %79, %80 : vector<16x20xf32>
    %82 = vector.extract_strided_slice %76 {offsets = [3, 60], sizes = [16, 20], strides = [1, 1]} : vector<22x140xf32> to vector<16x20xf32>
    %83 = arith.addf %81, %82 : vector<16x20xf32>
    %84 = vector.extract_strided_slice %76 {offsets = [4, 80], sizes = [16, 20], strides = [1, 1]} : vector<22x140xf32> to vector<16x20xf32>
    %85 = arith.addf %83, %84 : vector<16x20xf32>
    %86 = vector.extract_strided_slice %76 {offsets = [5, 100], sizes = [16, 20], strides = [1, 1]} : vector<22x140xf32> to vector<16x20xf32>
    %87 = arith.addf %85, %86 : vector<16x20xf32>
    %88 = vector.extract_strided_slice %76 {offsets = [6, 120], sizes = [16, 20], strides = [1, 1]} : vector<22x140xf32> to vector<16x20xf32>
    %89 = arith.addf %87, %88 : vector<16x20xf32>
    %c0_24 = arith.constant 0 : index
    %c0_25 = arith.constant 0 : index
    %90 = vector.load %arg8[%c0_24, %c0_25] : memref<1x20xf32, #tpu.memory_space<vmem>>, vector<1x20xf32>
    %91 = vector.broadcast %90 : vector<1x20xf32> to vector<16x20xf32>
    %92 = arith.addf %89, %91 : vector<16x20xf32>
    %93 = tpu.transpose %92, [1, 0] : vector<16x20xf32> -> vector<20x16xf32>
    %c0_26 = arith.constant 0 : index
    %c0_27 = arith.constant 0 : index
    %c0_28 = arith.constant 0 : index
    %94 = vector.load %arg9[%c0_26, %c0_27, %c0_28] : memref<1x20x16xf32, #tpu.memory_space<vmem>>, vector<1x20x16xf32>
    %95 = vector.shape_cast %94 : vector<1x20x16xf32> to vector<20x16xf32>
    %96 = vector.shape_cast %93 : vector<20x16xf32> to vector<1x20x16xf32>
    tpu.vector_store %arg9[%c0_26, %c0_27, %c0_28], %96 {strides = array<i32>} : memref<1x20x16xf32, #tpu.memory_space<vmem>>, vector<1x20x16xf32>,
    return
  }
  func.func @transform_0(%arg0: i32, %arg1: i32) -> (i32, i32, i32) {
    %c0_i32 = arith.constant 0 : i32
    %c0_i32_0 = arith.constant 0 : i32
    return %arg0, %arg1, %c0_i32 : i32, i32, i32
  }
  func.func @transform_1(%arg0: i32, %arg1: i32) -> (i32, i32, i32) {
    %c2_i32 = arith.constant 2 : i32
    %0 = arith.muli %arg1, %c2_i32 : i32
    %c1_i32 = arith.constant 1 : i32
    %1 = arith.subi %0, %c1_i32 : i32
    %c0_i32 = arith.constant 0 : i32
    %2 = arith.maxsi %1, %c0_i32 : i32
    %c0_i32_0 = arith.constant 0 : i32
    %c0_i32_1 = arith.constant 0 : i32
    return %arg0, %2, %c0_i32_0 : i32, i32, i32
  }
  func.func @transform_2(%arg0: i32, %arg1: i32) -> (i32, i32, i32) {
    %c1_i32 = arith.constant 1 : i32
    %0 = arith.addi %arg1, %c1_i32 : i32
    %c2_i32 = arith.constant 2 : i32
    %1 = arith.muli %0, %c2_i32 : i32
    %c1_i32_0 = arith.constant 1 : i32
    %2 = arith.minsi %1, %c1_i32_0 : i32
    %c0_i32 = arith.constant 0 : i32
    %c0_i32_1 = arith.constant 0 : i32
    return %arg0, %2, %c0_i32 : i32, i32, i32
  }
  func.func @transform_3(%arg0: i32, %arg1: i32) -> (i32, i32) {
    %c0_i32 = arith.constant 0 : i32
    %c0_i32_0 = arith.constant 0 : i32
    %c0_i32_1 = arith.constant 0 : i32
    return %c0_i32, %c0_i32_0 : i32, i32
  }
  func.func @transform_4(%arg0: i32, %arg1: i32) -> (i32, i32) {
    %c0_i32 = arith.constant 0 : i32
    %c0_i32_0 = arith.constant 0 : i32
    %c0_i32_1 = arith.constant 0 : i32
    return %c0_i32, %c0_i32_0 : i32, i32
  }
  func.func @transform_5(%arg0: i32, %arg1: i32) -> (i32, i32) {
    %c0_i32 = arith.constant 0 : i32
    %c0_i32_0 = arith.constant 0 : i32
    %c0_i32_1 = arith.constant 0 : i32
    return %c0_i32, %c0_i32_0 : i32, i32
  }
  func.func @transform_6(%arg0: i32, %arg1: i32) -> (i32, i32) {
    %c0_i32 = arith.constant 0 : i32
    %c0_i32_0 = arith.constant 0 : i32
    %c0_i32_1 = arith.constant 0 : i32
    return %c0_i32, %c0_i32_0 : i32, i32
  }
  func.func @transform_7(%arg0: i32, %arg1: i32) -> (i32, i32, i32) {
    %c0_i32 = arith.constant 0 : i32
    %c0_i32_0 = arith.constant 0 : i32
    return %arg0, %c0_i32, %arg1 : i32, i32, i32
  }
}

</mosaic_0001>

<llo_original>
// kernel: tpu_custom_call.1
$region0: #{tpu_custom_call.1}
  #allocation0 [shape = 'u32[]', space=smem, size = 0x4, offset = 0x4, fixed_abs, tag = 'smem constant byte address 0x4 - core index']
  #allocation1 [shape = 'u32[72,128]{1,0:T(1,128)}', space=vmem, size = 0x9000, scoped, tag = 'internal scratch']
  %s0 = inlined_call_operand.vmem [shape: bf16[2,16,1024], index: 0, kind: input, shape index: {}]
  %s1 = inlined_call_operand.vmem [shape: bf16[2,16,1024], index: 1, kind: input, shape index: {}]
  %s2 = inlined_call_operand.vmem [shape: bf16[2,16,1024], index: 2, kind: input, shape index: {}]
  %s3 = inlined_call_operand.vmem [shape: bf16[1024,224], index: 3, kind: input, shape index: {}]
  %s4 = inlined_call_operand.vmem [shape: f32[1,32], index: 4, kind: input, shape index: {}]
  %s5 = inlined_call_operand.vmem [shape: bf16[32,140], index: 5, kind: input, shape index: {}]
  %s6 = inlined_call_operand.vmem [shape: f32[1,20], index: 6, kind: input, shape index: {}]
  %s7 = inlined_call_operand.vmem [shape: f32[2,20,16], index: 7, kind: output, shape index: {}]
  %s8 = sld [smem:[#allocation0]]
  $region61: #{tpu_custom_call.1} parent=0
    _
  %s10 = ssub.s32 1, %s8
  %s11 = scalar_select 0, %s10, %s8
  loop: start=0, step=1, limit=4
  $region2: #{tpu_custom_call.1} parent=0 // loop_pre_header
    _
  $region3: #{tpu_custom_call.1} parent=0 // loop_header
    %s13 = sphi 0, %s17
    %p14 = scmp.ge.s32.totalorder %s13, 4
    %s20 = sphi 0, %s32
    %s21 = sphi 0, %s28
    %s22 = sphi 0, %s20
    %s23 = sphi 0, %s21
    %s24 = sphi 0, %s22
    %s25 = sphi 0, %s23
    %s37 = sphi 0, %s39
    %s40 = sphi 0, %s37
    %s41 = sphi 0, %s40
    %s57 = sphi 0, %s41
    %s73 = sphi 0, %s75
    %s76 = sphi 0, %s73
    %s77 = sphi 0, %s76
    %s93 = sphi 0, %s77
    %s109 = sphi 0, %s111
    %s112 = sphi 0, %s109
    %s113 = sphi 0, %s112
    %s129 = sphi 0, %s113
    %s133 = sphi 0, %s133
    %s135 = sphi 0, %s133
    %s136 = sphi 0, %s135
    %s150 = sphi 0, %s136
    %s154 = sphi 0, %s154
    %s156 = sphi 0, %s154
    %s157 = sphi 0, %s156
    %s171 = sphi 0, %s157
    %s175 = sphi 0, %s175
    %s177 = sphi 0, %s175
    %s178 = sphi 0, %s177
    %s192 = sphi 0, %s178
    %s196 = sphi 0, %s196
    %s198 = sphi 0, %s196
    %s199 = sphi 0, %s198
    %s213 = sphi 0, %s199
    %s221 = sphi 0, %s223
    %s224 = sphi 0, %s221
    %s225 = sphi 0, %s224
    %s241 = sphi 0, %s225
  $region4: #{tpu_custom_call.1} parent=0 // loop_header_branch
    %16 = sbr.rel (%p14) target = $region8
  $region5: #{tpu_custom_call.1} parent=0 // loop_body
    %s18 = ssub.s32 %s13, 1
    %s19 = ssub.s32 %s13, 2
    %s26 = sadd.s32 1, %s21
    %p27 = scmp.ge.s32.totalorder %s26, 1
    %s28 = scalar_select %p27, 0, %s26
    %s29 = sadd.s32 1, %s20
    %s30 = scalar_select %p27, %s29, %s20
    %p31 = scmp.ge.s32.totalorder %s30, 2
    %s32 = scalar_select %p31, 0, %s30
    %s33 = ssub.s32 %s20, %s32
    %s34 = ssub.s32 %s21, %s28
    %s35 = sor.u32 %s33, %s34
    %p36 = scmp.eq.s32.totalorder %s35, 0
    %s38 = sadd.s32 %s37, 1
    %s39 = scalar_select %p36, %s37, %s38
    %p42 = pneg %p36
    %p43 = scmp.eq.s32.totalorder %s13, 1
    %p44 = por %p42, %p43
    %p45 = scmp.ne.s32.totalorder %s37, %s40
    %p46 = scmp.eq.s32.totalorder %s13, 0
    %p47 = por %p45, %p46
    %p48 = scmp.ne.s32.totalorder %s37, %s40
    %p49 = scmp.eq.s32.totalorder %s18, 1
    %p50 = por %p48, %p49
    %p51 = scmp.ne.s32.totalorder %s40, %s41
    %p52 = scmp.eq.s32.totalorder %s18, 0
    %p53 = por %p51, %p52
    %p54 = scmp.ne.s32.totalorder %s40, %s41
    %p55 = scmp.eq.s32.totalorder %s19, 1
    %p56 = por %p54, %p55
    %p58 = scmp.ne.s32.totalorder %s41, %s57
    %p59 = scmp.eq.s32.totalorder %s19, 0
    %p60 = por %p58, %p59
    %s61 = smul.u32 %s21, 2
    %s62 = ssub.s32 %s61, 1
    %p63 = scmp.gt.s32.totalorder %s62, 0
    %s64 = scalar_select %p63, %s62, 0
    %s65 = smul.u32 %s28, 2
    %s66 = ssub.s32 %s65, 1
    %p67 = scmp.gt.s32.totalorder %s66, 0
    %s68 = scalar_select %p67, %s66, 0
    %s69 = ssub.s32 %s20, %s32
    %s70 = ssub.s32 %s64, %s68
    %s71 = sor.u32 %s69, %s70
    %p72 = scmp.eq.s32.totalorder %s71, 0
    %s74 = sadd.s32 %s73, 1
    %s75 = scalar_select %p72, %s73, %s74
    %p78 = pneg %p72
    %p79 = scmp.eq.s32.totalorder %s13, 1
    %p80 = por %p78, %p79
    %p81 = scmp.ne.s32.totalorder %s73, %s76
    %p82 = scmp.eq.s32.totalorder %s13, 0
    %p83 = por %p81, %p82
    %p84 = scmp.ne.s32.totalorder %s73, %s76
    %p85 = scmp.eq.s32.totalorder %s18, 1
    %p86 = por %p84, %p85
    %p87 = scmp.ne.s32.totalorder %s76, %s77
    %p88 = scmp.eq.s32.totalorder %s18, 0
    %p89 = por %p87, %p88
    %p90 = scmp.ne.s32.totalorder %s76, %s77
    %p91 = scmp.eq.s32.totalorder %s19, 1
    %p92 = por %p90, %p91
    %p94 = scmp.ne.s32.totalorder %s77, %s93
    %p95 = scmp.eq.s32.totalorder %s19, 0
    %p96 = por %p94, %p95
    %s97 = sadd.s32 %s21, 1
    %s98 = smul.u32 %s97, 2
    %p99 = scmp.lt.s32.totalorder %s98, 1
    %s100 = scalar_select %p99, %s98, 1
    %s101 = sadd.s32 %s28, 1
    %s102 = smul.u32 %s101, 2
    %p103 = scmp.lt.s32.totalorder %s102, 1
    %s104 = scalar_select %p103, %s102, 1
    %s105 = ssub.s32 %s20, %s32
    %s106 = ssub.s32 %s100, %s104
    %s107 = sor.u32 %s105, %s106
    %p108 = scmp.eq.s32.totalorder %s107, 0
    %s110 = sadd.s32 %s109, 1
    %s111 = scalar_select %p108, %s109, %s110
    %p114 = pneg %p108
    %p115 = scmp.eq.s32.totalorder %s13, 1
    %p116 = por %p114, %p115
    %p117 = scmp.ne.s32.totalorder %s109, %s112
    %p118 = scmp.eq.s32.totalorder %s13, 0
    %p119 = por %p117, %p118
    %p120 = scmp.ne.s32.totalorder %s109, %s112
    %p121 = scmp.eq.s32.totalorder %s18, 1
    %p122 = por %p120, %p121
    %p123 = scmp.ne.s32.totalorder %s112, %s113
    %p124 = scmp.eq.s32.totalorder %s18, 0
    %p125 = por %p123, %p124
    %p126 = scmp.ne.s32.totalorder %s112, %s113
    %p127 = scmp.eq.s32.totalorder %s19, 1
    %p128 = por %p126, %p127
    %p130 = scmp.ne.s32.totalorder %s113, %s129
    %p131 = scmp.eq.s32.totalorder %s19, 0
    %p132 = por %p130, %p131
    %s134 = sadd.s32 %s133, 1
    %p137 = scmp.eq.s32.totalorder %s13, 1
    %p138 = scmp.ne.s32.totalorder %s133, %s135
    %p139 = scmp.eq.s32.totalorder %s13, 0
    %p140 = por %p138, %p139
    %p141 = scmp.ne.s32.totalorder %s133, %s135
    %p142 = scmp.eq.s32.totalorder %s18, 1
    %p143 = por %p141, %p142
    %p144 = scmp.ne.s32.totalorder %s135, %s136
    %p145 = scmp.eq.s32.totalorder %s18, 0
    %p146 = por %p144, %p145
    %p147 = scmp.ne.s32.totalorder %s135, %s136
    %p148 = scmp.eq.s32.totalorder %s19, 1
    %p149 = por %p147, %p148
    %p151 = scmp.ne.s32.totalorder %s136, %s150
    %p152 = scmp.eq.s32.totalorder %s19, 0
    %p153 = por %p151, %p152
    %s155 = sadd.s32 %s154, 1
    %p158 = scmp.eq.s32.totalorder %s13, 1
    %p159 = scmp.ne.s32.totalorder %s154, %s156
    %p160 = scmp.eq.s32.totalorder %s13, 0
    %p161 = por %p159, %p160
    %p162 = scmp.ne.s32.totalorder %s154, %s156
    %p163 = scmp.eq.s32.totalorder %s18, 1
    %p164 = por %p162, %p163
    %p165 = scmp.ne.s32.totalorder %s156, %s157
    %p166 = scmp.eq.s32.totalorder %s18, 0
    %p167 = por %p165, %p166
    %p168 = scmp.ne.s32.totalorder %s156, %s157
    %p169 = scmp.eq.s32.totalorder %s19, 1
    %p170 = por %p168, %p169
    %p172 = scmp.ne.s32.totalorder %s157, %s171
    %p173 = scmp.eq.s32.totalorder %s19, 0
    %p174 = por %p172, %p173
    %s176 = sadd.s32 %s175, 1
    %p179 = scmp.eq.s32.totalorder %s13, 1
    %p180 = scmp.ne.s32.totalorder %s175, %s177
    %p181 = scmp.eq.s32.totalorder %s13, 0
    %p182 = por %p180, %p181
    %p183 = scmp.ne.s32.totalorder %s175, %s177
    %p184 = scmp.eq.s32.totalorder %s18, 1
    %p185 = por %p183, %p184
    %p186 = scmp.ne.s32.totalorder %s177, %s178
    %p187 = scmp.eq.s32.totalorder %s18, 0
    %p188 = por %p186, %p187
    %p189 = scmp.ne.s32.totalorder %s177, %s178
    %p190 = scmp.eq.s32.totalorder %s19, 1
    %p191 = por %p189, %p190
    %p193 = scmp.ne.s32.totalorder %s178, %s192
    %p194 = scmp.eq.s32.totalorder %s19, 0
    %p195 = por %p193, %p194
    %s197 = sadd.s32 %s196, 1
    %p200 = scmp.eq.s32.totalorder %s13, 1
    %p201 = scmp.ne.s32.totalorder %s196, %s198
    %p202 = scmp.eq.s32.totalorder %s13, 0
    %p203 = por %p201, %p202
    %p204 = scmp.ne.s32.totalorder %s196, %s198
    %p205 = scmp.eq.s32.totalorder %s18, 1
    %p206 = por %p204, %p205
    %p207 = scmp.ne.s32.totalorder %s198, %s199
    %p208 = scmp.eq.s32.totalorder %s18, 0
    %p209 = por %p207, %p208
    %p210 = scmp.ne.s32.totalorder %s198, %s199
    %p211 = scmp.eq.s32.totalorder %s19, 1
    %p212 = por %p210, %p211
    %p214 = scmp.ne.s32.totalorder %s199, %s213
    %p215 = scmp.eq.s32.totalorder %s19, 0
    %p216 = por %p214, %p215
    %s217 = ssub.s32 %s20, %s32
    %s218 = ssub.s32 %s21, %s28
    %s219 = sor.u32 %s217, %s218
    %p220 = scmp.eq.s32.totalorder %s219, 0
    %s222 = sadd.s32 %s221, 1
    %s223 = scalar_select %p220, %s221, %s222
    %p226 = pneg %p220
    %p227 = scmp.eq.s32.totalorder %s13, 1
    %p228 = por %p226, %p227
    %p229 = scmp.ne.s32.totalorder %s221, %s224
    %p230 = scmp.eq.s32.totalorder %s13, 0
    %p231 = por %p229, %p230
    %p232 = scmp.ne.s32.totalorder %s221, %s224
    %p233 = scmp.eq.s32.totalorder %s18, 1
    %p234 = por %p232, %p233
    %p235 = scmp.ne.s32.totalorder %s224, %s225
    %p236 = scmp.eq.s32.totalorder %s18, 0
    %p237 = por %p235, %p236
    %p238 = scmp.ne.s32.totalorder %s224, %s225
    %p239 = scmp.eq.s32.totalorder %s19, 1
    %p240 = por %p238, %p239
    %p242 = scmp.ne.s32.totalorder %s225, %s241
    %p243 = scmp.eq.s32.totalorder %s19, 0
    %p244 = por %p242, %p243
    %p245 = scmp.le.s32.totalorder 1, %s13
    %p246 = scmp.lt.s32.totalorder %s13, 3
    %p247 = pnand %p245, %p246
    %p248 = pneg %p247
    // Predicated region
    $region9: #{tpu_custom_call.1} parent=5 // pred_check
      _
    $region10: #{tpu_custom_call.1} parent=5 // pred_check_branch
      %250 = sbr.rel (%p247) target = $region12
    $region11: #{tpu_custom_call.1} parent=5 // pred_region
      %s251 = ssub.s32 %s13, 1
      // Predicated region
      $region13: #{tpu_custom_call.1} parent=11 // pred_check
        %p252 = pneg %p146
      $region14: #{tpu_custom_call.1} parent=11 // pred_check_branch
        %254 = sbr.rel (%p252) target = $region16
      $region15: #{tpu_custom_call.1} parent=11 // pred_region
        _
      $region16: #{tpu_custom_call.1} parent=11 // pred_fallthru
        _
      // Predicated region
      $region17: #{tpu_custom_call.1} parent=11 // pred_check
        %p255 = pneg %p167
      $region18: #{tpu_custom_call.1} parent=11 // pred_check_branch
        %257 = sbr.rel (%p255) target = $region20
      $region19: #{tpu_custom_call.1} parent=11 // pred_region
        _
      $region20: #{tpu_custom_call.1} parent=11 // pred_fallthru
        _
      // Predicated region
      $region21: #{tpu_custom_call.1} parent=11 // pred_check
        %p258 = pneg %p188
      $region22: #{tpu_custom_call.1} parent=11 // pred_check_branch
        %260 = sbr.rel (%p258) target = $region24
      $region23: #{tpu_custom_call.1} parent=11 // pred_region
        _
      $region24: #{tpu_custom_call.1} parent=11 // pred_fallthru
        _
      // Predicated region
      $region25: #{tpu_custom_call.1} parent=11 // pred_check
        %p261 = pneg %p209
      $region26: #{tpu_custom_call.1} parent=11 // pred_check_branch
        %263 = sbr.rel (%p261) target = $region28
      $region27: #{tpu_custom_call.1} parent=11 // pred_region
        _
      $region28: #{tpu_custom_call.1} parent=11 // pred_fallthru
        _
    $region12: #{tpu_custom_call.1} parent=5 // pred_fallthru
      _
    %p264 = scmp.lt.s32.totalorder %s13, 2
    // Predicated region
    $region29: #{tpu_custom_call.1} parent=5 // pred_check
      %p265 = pneg %p264
    $region30: #{tpu_custom_call.1} parent=5 // pred_check_branch
      %267 = sbr.rel (%p265) target = $region32
    $region31: #{tpu_custom_call.1} parent=5 // pred_region
      // Predicated region
      $region33: #{tpu_custom_call.1} parent=31 // pred_check
        %p268 = pneg %p47
      $region34: #{tpu_custom_call.1} parent=31 // pred_check_branch
        %270 = sbr.rel (%p268) target = $region36
      $region35: #{tpu_custom_call.1} parent=31 // pred_region
        %s271 = smul.u32 2, %s21
        %p272 = scmp.lt.s32.totalorder %s20, 1
        %s273 = scalar_select %p272, %s20, 1
        %p274 = scmp.lt.s32.totalorder %s271, 1
        %s275 = scalar_select %p274, %s271, 1
        %s276 = smul.addr %s275, 8
        %s277 = smul.addr %s273, 16
        %s278 = sadd.s32 %s276, %s277
        %s279 = smul.addr %s278, 4
        %s280 = scalar_lea.vmem %s0, %s279
        %s281 = smul.u32 2, %s21
      $region36: #{tpu_custom_call.1} parent=31 // pred_fallthru
        _
      // Predicated region
      $region37: #{tpu_custom_call.1} parent=31 // pred_check
        %p282 = pneg %p83
      $region38: #{tpu_custom_call.1} parent=31 // pred_check_branch
        %284 = sbr.rel (%p282) target = $region40
      $region39: #{tpu_custom_call.1} parent=31 // pred_region
        %s285 = smul.u32 %s21, 2
        %s286 = ssub.s32 %s285, 1
        %p287 = scmp.gt.s32.totalorder %s286, 0
        %s288 = scalar_select %p287, %s286, 0
        %p289 = scmp.lt.s32.totalorder %s20, 1
        %s290 = scalar_select %p289, %s20, 1
        %p291 = scmp.lt.s32.totalorder %s288, 1
        %s292 = scalar_select %p291, %s288, 1
        %s293 = smul.addr %s292, 8
        %s294 = smul.addr %s290, 16
        %s295 = sadd.s32 %s293, %s294
        %s296 = smul.addr %s295, 4
        %s297 = scalar_lea.vmem %s1, %s296
        %s298 = smul.u32 %s21, 2
        %s299 = ssub.s32 %s298, 1
        %p300 = scmp.gt.s32.totalorder %s299, 0
        %s301 = scalar_select %p300, %s299, 0
      $region40: #{tpu_custom_call.1} parent=31 // pred_fallthru
        _
      // Predicated region
      $region41: #{tpu_custom_call.1} parent=31 // pred_check
        %p302 = pneg %p119
      $region42: #{tpu_custom_call.1} parent=31 // pred_check_branch
        %304 = sbr.rel (%p302) target = $region44
      $region43: #{tpu_custom_call.1} parent=31 // pred_region
        %s305 = sadd.s32 %s21, 1
        %s306 = smul.u32 %s305, 2
        %p307 = scmp.lt.s32.totalorder %s306, 1
        %s308 = scalar_select %p307, %s306, 1
        %p309 = scmp.lt.s32.totalorder %s20, 1
        %s310 = scalar_select %p309, %s20, 1
        %p311 = scmp.lt.s32.totalorder %s308, 1
        %s312 = scalar_select %p311, %s308, 1
        %s313 = smul.addr %s312, 8
        %s314 = smul.addr %s310, 16
        %s315 = sadd.s32 %s313, %s314
        %s316 = smul.addr %s315, 4
        %s317 = scalar_lea.vmem %s2, %s316
        %s318 = sadd.s32 %s21, 1
        %s319 = smul.u32 %s318, 2
        %p320 = scmp.lt.s32.totalorder %s319, 1
        %s321 = scalar_select %p320, %s319, 1
      $region44: #{tpu_custom_call.1} parent=31 // pred_fallthru
        _
    $region32: #{tpu_custom_call.1} parent=5 // pred_fallthru
      _
    %p322 = scmp.le.s32.totalorder 1, %s13
    %p323 = scmp.lt.s32.totalorder %s13, 3
    %p324 = pnand %p322, %p323
    %p325 = pneg %p324
    // Predicated region
    $region45: #{tpu_custom_call.1} parent=5 // pred_check
      _
    $region46: #{tpu_custom_call.1} parent=5 // pred_check_branch
      %327 = sbr.rel (%p324) target = $region48
    $region47: #{tpu_custom_call.1} parent=5 // pred_region
      %s328 = ssub.s32 %s13, 1
      %s329 = smul.u32 2, %s23
      %p330 = scmp.lt.s32.totalorder %s22, 1
      %s331 = scalar_select %p330, %s22, 1
      %p332 = scmp.lt.s32.totalorder %s329, 1
      %s333 = scalar_select %p332, %s329, 1
      %s334 = smul.addr %s333, 8
      %s335 = smul.addr %s331, 16
      %s336 = sadd.s32 %s334, %s335
      %s337 = smul.addr %s336, 4
      %s338 = scalar_lea.vmem %s0, %s337
      %p339 = pneg %p53
      %p340 = pneg %p50
      %s341 = smul.u32 %s23, 2
      %s342 = ssub.s32 %s341, 1
      %p343 = scmp.gt.s32.totalorder %s342, 0
      %s344 = scalar_select %p343, %s342, 0
      %p345 = scmp.lt.s32.totalorder %s22, 1
      %s346 = scalar_select %p345, %s22, 1
      %p347 = scmp.lt.s32.totalorder %s344, 1
      %s348 = scalar_select %p347, %s344, 1
      %s349 = smul.addr %s348, 8
      %s350 = smul.addr %s346, 16
      %s351 = sadd.s32 %s349, %s350
      %s352 = smul.addr %s351, 4
      %s353 = scalar_lea.vmem %s1, %s352
      %p354 = pneg %p89
      %p355 = pneg %p86
      %s356 = sadd.s32 %s23, 1
      %s357 = smul.u32 %s356, 2
      %p358 = scmp.lt.s32.totalorder %s357, 1
      %s359 = scalar_select %p358, %s357, 1
      %p360 = scmp.lt.s32.totalorder %s22, 1
      %s361 = scalar_select %p360, %s22, 1
      %p362 = scmp.lt.s32.totalorder %s359, 1
      %s363 = scalar_select %p362, %s359, 1
      %s364 = smul.addr %s363, 8
      %s365 = smul.addr %s361, 16
      %s366 = sadd.s32 %s364, %s365
      %s367 = smul.addr %s366, 4
      %s368 = scalar_lea.vmem %s2, %s367
      %p369 = pneg %p125
      %p370 = pneg %p122
      %p371 = pneg %p146
      %p372 = pneg %p143
      %p373 = pneg %p167
      %p374 = pneg %p164
      %p375 = pneg %p188
      %p376 = pneg %p185
      %p377 = pneg %p209
      %p378 = pneg %p206
      %p379 = pneg %p237
      %p380 = pneg %p234
      %p381 = scmp.lt.s32.totalorder %s22, 1
      %s382 = scalar_select %p381, %s22, 1
      %p383 = scmp.lt.s32.totalorder %s23, 0
      %s384 = scalar_select %p383, %s23, 0
      %s385 = smul.addr %s382, 3
      %s386 = sadd.s32 %s384, %s385
      %s387 = smul.addr %s386, 8
      %s388 = scalar_lea.vmem %s7, %s387
      %s389 = smul.u32 2, %s23
      %p390 = scmp.lt.s32.totalorder %s22, 1
      %s391 = scalar_select %p390, %s22, 1
      %p392 = scmp.lt.s32.totalorder %s389, 1
      %s393 = scalar_select %p392, %s389, 1
      %s394 = smul.addr %s393, 8
      %s395 = smul.addr %s391, 16
      %s396 = sadd.s32 %s394, %s395
      %s397 = smul.addr %s396, 4
      %s398 = scalar_lea.vmem %s0, %s397
      %s399 = smul.u32 2, %s23
      %s400 = smul.u32 %s23, 2
      %s401 = ssub.s32 %s400, 1
      %p402 = scmp.gt.s32.totalorder %s401, 0
      %s403 = scalar_select %p402, %s401, 0
      %p404 = scmp.lt.s32.totalorder %s22, 1
      %s405 = scalar_select %p404, %s22, 1
      %p406 = scmp.lt.s32.totalorder %s403, 1
      %s407 = scalar_select %p406, %s403, 1
      %s408 = smul.addr %s407, 8
      %s409 = smul.addr %s405, 16
      %s410 = sadd.s32 %s408, %s409
      %s411 = smul.addr %s410, 4
      %s412 = scalar_lea.vmem %s1, %s411
      %s413 = smul.u32 %s23, 2
      %s414 = ssub.s32 %s413, 1
      %p415 = scmp.gt.s32.totalorder %s414, 0
      %s416 = scalar_select %p415, %s414, 0
      %s417 = sadd.s32 %s23, 1
      %s418 = smul.u32 %s417, 2
      %p419 = scmp.lt.s32.totalorder %s418, 1
      %s420 = scalar_select %p419, %s418, 1
      %p421 = scmp.lt.s32.totalorder %s22, 1
      %s422 = scalar_select %p421, %s22, 1
      %p423 = scmp.lt.s32.totalorder %s420, 1
      %s424 = scalar_select %p423, %s420, 1
      %s425 = smul.addr %s424, 8
      %s426 = smul.addr %s422, 16
      %s427 = sadd.s32 %s425, %s426
      %s428 = smul.addr %s427, 4
      %s429 = scalar_lea.vmem %s2, %s428
      %s430 = sadd.s32 %s23, 1
      %s431 = smul.u32 %s430, 2
      %p432 = scmp.lt.s32.totalorder %s431, 1
      %s433 = scalar_select %p432, %s431, 1
      %p434 = scmp.lt.s32.totalorder %s22, 1
      %s435 = scalar_select %p434, %s22, 1
      %p436 = scmp.lt.s32.totalorder %s23, 0
      %s437 = scalar_select %p436, %s23, 0
      %s438 = smul.addr %s435, 3
      %s439 = sadd.s32 %s437, %s438
      %s440 = smul.addr %s439, 8
      %s441 = scalar_lea.vmem %s7, %s440
      %s443 = smul.u32 %s23, 16
      %v444 = vld [vmem:[%s398] sm:$0xff]
      %v445 = vld [vmem:[%s398 + $0x8] sm:$0xff]
      %v446 = vld [vmem:[%s398 + $0x10] sm:$0xff]
      %v447 = vld [vmem:[%s398 + $0x18] sm:$0xff]
      %v448 = vld [vmem:[%s398 + $0x20] sm:$0xff]
      %v449 = vld [vmem:[%s398 + $0x28] sm:$0xff]
      %v450 = vld [vmem:[%s398 + $0x30] sm:$0xff]
      %v451 = vld [vmem:[%s398 + $0x38] sm:$0xff]
      %v452 = vld [vmem:[%s412] sm:$0xee]
      %v453 = vld [vmem:[%s412 + $0x8] sm:$0xee]
      %v454 = vld [vmem:[%s412 + $0x10] sm:$0xee]
      %v455 = vld [vmem:[%s412 + $0x18] sm:$0xee]
      %v456 = vld [vmem:[%s429] sm:$0x77]
      %v457 = vld [vmem:[%s429 + $0x8] sm:$0x77]
      %v458 = vld [vmem:[%s429 + $0x10] sm:$0x77]
      %v459 = vld [vmem:[%s429 + $0x18] sm:$0x77]
      %v460 = vld [vmem:[%s3] sm:$0xff]
      %v461 = vld [vmem:[%s3 + $0x8] sm:$0xff]
      %v462 = vld [vmem:[%s3 + $0x10] sm:$0xff]
      %v463 = vld [vmem:[%s3 + $0x18] sm:$0xff]
      %v464 = vld [vmem:[%s3 + $0x20] sm:$0xff]
      %v465 = vld [vmem:[%s3 + $0x28] sm:$0xff]
      %v466 = vld [vmem:[%s3 + $0x30] sm:$0xff]
      %v467 = vld [vmem:[%s3 + $0x38] sm:$0xff]
      %v468 = vld [vmem:[%s3 + $0x40] sm:$0xff]
      %v469 = vld [vmem:[%s3 + $0x48] sm:$0xff]
      %v470 = vld [vmem:[%s3 + $0x50] sm:$0xff]
      %v471 = vld [vmem:[%s3 + $0x58] sm:$0xff]
      %v472 = vld [vmem:[%s3 + $0x60] sm:$0xff]
      %v473 = vld [vmem:[%s3 + $0x68] sm:$0xff]
      %v474 = vld [vmem:[%s3 + $0x70] sm:$0xff]
      %v475 = vld [vmem:[%s3 + $0x78] sm:$0xff]
      %v476 = vld [vmem:[%s3 + $0x80] sm:$0xff]
      %v477 = vld [vmem:[%s3 + $0x88] sm:$0xff]
      %v478 = vld [vmem:[%s3 + $0x90] sm:$0xff]
      %v479 = vld [vmem:[%s3 + $0x98] sm:$0xff]
      %v480 = vld [vmem:[%s3 + $0xa0] sm:$0xff]
      %v481 = vld [vmem:[%s3 + $0xa8] sm:$0xff]
      %v482 = vld [vmem:[%s3 + $0xb0] sm:$0xff]
      %v483 = vld [vmem:[%s3 + $0xb8] sm:$0xff]
      %v484 = vld [vmem:[%s3 + $0xc0] sm:$0xff]
      %v485 = vld [vmem:[%s3 + $0xc8] sm:$0xff]
      %v486 = vld [vmem:[%s3 + $0xd0] sm:$0xff]
      %v487 = vld [vmem:[%s3 + $0xd8] sm:$0xff]
      %v488 = vld [vmem:[%s3 + $0xe0] sm:$0xff]
      %v489 = vld [vmem:[%s3 + $0xe8] sm:$0xff]
      %v490 = vld [vmem:[%s3 + $0xf0] sm:$0xff]
      %v491 = vld [vmem:[%s3 + $0xf8] sm:$0xff]
      %v492 = vld [vmem:[%s3 + $0x100] sm:$0xff]
      %v493 = vld [vmem:[%s3 + $0x108] sm:$0xff]
      %v494 = vld [vmem:[%s3 + $0x110] sm:$0xff]
      %v495 = vld [vmem:[%s3 + $0x118] sm:$0xff]
      %v496 = vld [vmem:[%s3 + $0x120] sm:$0xff]
      %v497 = vld [vmem:[%s3 + $0x128] sm:$0xff]
      %v498 = vld [vmem:[%s3 + $0x130] sm:$0xff]
      %v499 = vld [vmem:[%s3 + $0x138] sm:$0xff]
      %v500 = vld [vmem:[%s3 + $0x140] sm:$0xff]
      %v501 = vld [vmem:[%s3 + $0x148] sm:$0xff]
      %v502 = vld [vmem:[%s3 + $0x150] sm:$0xff]
      %v503 = vld [vmem:[%s3 + $0x158] sm:$0xff]
      %v504 = vld [vmem:[%s3 + $0x160] sm:$0xff]
      %v505 = vld [vmem:[%s3 + $0x168] sm:$0xff]
      %v506 = vld [vmem:[%s3 + $0x170] sm:$0xff]
      %v507 = vld [vmem:[%s3 + $0x178] sm:$0xff]
      %v508 = vld [vmem:[%s3 + $0x180] sm:$0xff]
      %v509 = vld [vmem:[%s3 + $0x188] sm:$0xff]
      %v510 = vld [vmem:[%s3 + $0x190] sm:$0xff]
      %v511 = vld [vmem:[%s3 + $0x198] sm:$0xff]
      %v512 = vld [vmem:[%s3 + $0x1a0] sm:$0xff]
      %v513 = vld [vmem:[%s3 + $0x1a8] sm:$0xff]
      %v514 = vld [vmem:[%s3 + $0x1b0] sm:$0xff]
      %v515 = vld [vmem:[%s3 + $0x1b8] sm:$0xff]
      %v516 = vld [vmem:[%s3 + $0x1c0] sm:$0xff]
      %v517 = vld [vmem:[%s3 + $0x1c8] sm:$0xff]
      %v518 = vld [vmem:[%s3 + $0x1d0] sm:$0xff]
      %v519 = vld [vmem:[%s3 + $0x1d8] sm:$0xff]
      %v520 = vld [vmem:[%s3 + $0x1e0] sm:$0xff]
      %v521 = vld [vmem:[%s3 + $0x1e8] sm:$0xff]
      %v522 = vld [vmem:[%s3 + $0x1f0] sm:$0xff]
      %v523 = vld [vmem:[%s3 + $0x1f8] sm:$0xff]
      %v524 = vld [vmem:[%s3 + $0x200] sm:$0xff]
      %v525 = vld [vmem:[%s3 + $0x208] sm:$0xff]
      %v526 = vld [vmem:[%s3 + $0x210] sm:$0xff]
      %v527 = vld [vmem:[%s3 + $0x218] sm:$0xff]
      %v528 = vld [vmem:[%s3 + $0x220] sm:$0xff]
      %v529 = vld [vmem:[%s3 + $0x228] sm:$0xff]
      %v530 = vld [vmem:[%s3 + $0x230] sm:$0xff]
      %v531 = vld [vmem:[%s3 + $0x238] sm:$0xff]
      %v532 = vld [vmem:[%s3 + $0x240] sm:$0xff]
      %v533 = vld [vmem:[%s3 + $0x248] sm:$0xff]
      %v534 = vld [vmem:[%s3 + $0x250] sm:$0xff]
      %v535 = vld [vmem:[%s3 + $0x258] sm:$0xff]
      %v536 = vld [vmem:[%s3 + $0x260] sm:$0xff]
      %v537 = vld [vmem:[%s3 + $0x268] sm:$0xff]
      %v538 = vld [vmem:[%s3 + $0x270] sm:$0xff]
      %v539 = vld [vmem:[%s3 + $0x278] sm:$0xff]
      %v540 = vld [vmem:[%s3 + $0x280] sm:$0xff]
      %v541 = vld [vmem:[%s3 + $0x288] sm:$0xff]
      %v542 = vld [vmem:[%s3 + $0x290] sm:$0xff]
      %v543 = vld [vmem:[%s3 + $0x298] sm:$0xff]
      %v544 = vld [vmem:[%s3 + $0x2a0] sm:$0xff]
      %v545 = vld [vmem:[%s3 + $0x2a8] sm:$0xff]
      %v546 = vld [vmem:[%s3 + $0x2b0] sm:$0xff]
      %v547 = vld [vmem:[%s3 + $0x2b8] sm:$0xff]
      %v548 = vld [vmem:[%s3 + $0x2c0] sm:$0xff]
      %v549 = vld [vmem:[%s3 + $0x2c8] sm:$0xff]
      %v550 = vld [vmem:[%s3 + $0x2d0] sm:$0xff]
      %v551 = vld [vmem:[%s3 + $0x2d8] sm:$0xff]
      %v552 = vld [vmem:[%s3 + $0x2e0] sm:$0xff]
      %v553 = vld [vmem:[%s3 + $0x2e8] sm:$0xff]
      %v554 = vld [vmem:[%s3 + $0x2f0] sm:$0xff]
      %v555 = vld [vmem:[%s3 + $0x2f8] sm:$0xff]
      %v556 = vld [vmem:[%s3 + $0x300] sm:$0xff]
      %v557 = vld [vmem:[%s3 + $0x308] sm:$0xff]
      %v558 = vld [vmem:[%s3 + $0x310] sm:$0xff]
      %v559 = vld [vmem:[%s3 + $0x318] sm:$0xff]
      %v560 = vld [vmem:[%s3 + $0x320] sm:$0xff]
      %v561 = vld [vmem:[%s3 + $0x328] sm:$0xff]
      %v562 = vld [vmem:[%s3 + $0x330] sm:$0xff]
      %v563 = vld [vmem:[%s3 + $0x338] sm:$0xff]
      %v564 = vld [vmem:[%s3 + $0x340] sm:$0xff]
      %v565 = vld [vmem:[%s3 + $0x348] sm:$0xff]
      %v566 = vld [vmem:[%s3 + $0x350] sm:$0xff]
      %v567 = vld [vmem:[%s3 + $0x358] sm:$0xff]
      %v568 = vld [vmem:[%s3 + $0x360] sm:$0xff]
      %v569 = vld [vmem:[%s3 + $0x368] sm:$0xff]
      %v570 = vld [vmem:[%s3 + $0x370] sm:$0xff]
      %v571 = vld [vmem:[%s3 + $0x378] sm:$0xff]
      %v572 = vld [vmem:[%s3 + $0x380] sm:$0xff]
      %v573 = vld [vmem:[%s3 + $0x388] sm:$0xff]
      %v574 = vld [vmem:[%s3 + $0x390] sm:$0xff]
      %v575 = vld [vmem:[%s3 + $0x398] sm:$0xff]
      %v576 = vld [vmem:[%s3 + $0x3a0] sm:$0xff]
      %v577 = vld [vmem:[%s3 + $0x3a8] sm:$0xff]
      %v578 = vld [vmem:[%s3 + $0x3b0] sm:$0xff]
      %v579 = vld [vmem:[%s3 + $0x3b8] sm:$0xff]
      %v580 = vld [vmem:[%s3 + $0x3c0] sm:$0xff]
      %v581 = vld [vmem:[%s3 + $0x3c8] sm:$0xff]
      %v582 = vld [vmem:[%s3 + $0x3d0] sm:$0xff]
      %v583 = vld [vmem:[%s3 + $0x3d8] sm:$0xff]
      %v584 = vld [vmem:[%s3 + $0x3e0] sm:$0xff]
      %v585 = vld [vmem:[%s3 + $0x3e8] sm:$0xff]
      %v586 = vld [vmem:[%s3 + $0x3f0] sm:$0xff]
      %v587 = vld [vmem:[%s3 + $0x3f8] sm:$0xff]
      %v596 = vunpack.c.l.b16 %v444
      %v597 = vunpack.c.h.b16 %v444
      %v598 = vunpack.c.l.b16 %v445
      %v599 = vunpack.c.h.b16 %v445
      %v600 = vunpack.c.l.b16 %v446
      %v601 = vunpack.c.h.b16 %v446
      %v602 = vunpack.c.l.b16 %v447
      %v603 = vunpack.c.h.b16 %v447
      %v604 = vunpack.c.l.b16 %v448
      %v605 = vunpack.c.h.b16 %v448
      %v606 = vunpack.c.l.b16 %v449
      %v607 = vunpack.c.h.b16 %v449
      %v608 = vunpack.c.l.b16 %v450
      %v609 = vunpack.c.h.b16 %v450
      %v610 = vunpack.c.l.b16 %v451
      %v611 = vunpack.c.h.b16 %v451
      %v612 = vpack.c.b16 %v604, %v596
      %v613 = vpack.c.b16 %v605, %v597
      %v614 = vpack.c.b16 %v606, %v598
      %v615 = vpack.c.b16 %v607, %v599
      %v616 = vpack.c.b16 %v608, %v600
      %v617 = vpack.c.b16 %v609, %v601
      %v618 = vpack.c.b16 %v610, %v602
      %v619 = vpack.c.b16 %v611, %v603
      %v756 = vunpack.c.l.b16 %v460
      %v757 = vunpack.c.h.b16 %v460
      %v758 = vunpack.c.l.b16 %v461
      %v759 = vunpack.c.h.b16 %v461
      %v760 = vunpack.c.l.b16 %v462
      %v761 = vunpack.c.h.b16 %v462
      %v762 = vunpack.c.l.b16 %v463
      %v763 = vunpack.c.h.b16 %v463
      %v764 = vunpack.c.l.b16 %v464
      %v765 = vunpack.c.h.b16 %v464
      %v766 = vunpack.c.l.b16 %v465
      %v767 = vunpack.c.h.b16 %v465
      %v768 = vunpack.c.l.b16 %v466
      %v769 = vunpack.c.h.b16 %v466
      %v770 = vunpack.c.l.b16 %v467
      %v771 = vunpack.c.h.b16 %v467
      %v772 = vunpack.c.l.b16 %v468
      %v773 = vunpack.c.h.b16 %v468
      %v774 = vunpack.c.l.b16 %v469
      %v775 = vunpack.c.h.b16 %v469
      %v776 = vunpack.c.l.b16 %v470
      %v777 = vunpack.c.h.b16 %v470
      %v778 = vunpack.c.l.b16 %v471
      %v779 = vunpack.c.h.b16 %v471
      %v780 = vunpack.c.l.b16 %v472
      %v781 = vunpack.c.h.b16 %v472
      %v782 = vunpack.c.l.b16 %v473
      %v783 = vunpack.c.h.b16 %v473
      %v784 = vunpack.c.l.b16 %v474
      %v785 = vunpack.c.h.b16 %v474
      %v786 = vunpack.c.l.b16 %v475
      %v787 = vunpack.c.h.b16 %v475
      %v788 = vunpack.c.l.b16 %v476
      %v789 = vunpack.c.h.b16 %v476
      %v790 = vunpack.c.l.b16 %v477
      %v791 = vunpack.c.h.b16 %v477
      %v792 = vunpack.c.l.b16 %v478
      %v793 = vunpack.c.h.b16 %v478
      %v794 = vunpack.c.l.b16 %v479
      %v795 = vunpack.c.h.b16 %v479
      %v796 = vunpack.c.l.b16 %v480
      %v797 = vunpack.c.h.b16 %v480
      %v798 = vunpack.c.l.b16 %v481
      %v799 = vunpack.c.h.b16 %v481
      %v800 = vunpack.c.l.b16 %v482
      %v801 = vunpack.c.h.b16 %v482
      %v802 = vunpack.c.l.b16 %v483
      %v803 = vunpack.c.h.b16 %v483
      %v804 = vunpack.c.l.b16 %v484
      %v805 = vunpack.c.h.b16 %v484
      %v806 = vunpack.c.l.b16 %v485
      %v807 = vunpack.c.h.b16 %v485
      %v808 = vunpack.c.l.b16 %v486
      %v809 = vunpack.c.h.b16 %v486
      %v810 = vunpack.c.l.b16 %v487
      %v811 = vunpack.c.h.b16 %v487
      %v812 = vunpack.c.l.b16 %v488
      %v813 = vunpack.c.h.b16 %v488
      %v814 = vunpack.c.l.b16 %v489
      %v815 = vunpack.c.h.b16 %v489
      %v816 = vunpack.c.l.b16 %v490
      %v817 = vunpack.c.h.b16 %v490
      %v818 = vunpack.c.l.b16 %v491
      %v819 = vunpack.c.h.b16 %v491
      %v820 = vunpack.c.l.b16 %v492
      %v821 = vunpack.c.h.b16 %v492
      %v822 = vunpack.c.l.b16 %v493
      %v823 = vunpack.c.h.b16 %v493
      %v824 = vunpack.c.l.b16 %v494
      %v825 = vunpack.c.h.b16 %v494
      %v826 = vunpack.c.l.b16 %v495
      %v827 = vunpack.c.h.b16 %v495
      %v828 = vunpack.c.l.b16 %v496
      %v829 = vunpack.c.h.b16 %v496
      %v830 = vunpack.c.l.b16 %v497
      %v831 = vunpack.c.h.b16 %v497
      %v832 = vunpack.c.l.b16 %v498
      %v833 = vunpack.c.h.b16 %v498
      %v834 = vunpack.c.l.b16 %v499
      %v835 = vunpack.c.h.b16 %v499
      %v836 = vunpack.c.l.b16 %v500
      %v837 = vunpack.c.h.b16 %v500
      %v838 = vunpack.c.l.b16 %v501
      %v839 = vunpack.c.h.b16 %v501
      %v840 = vunpack.c.l.b16 %v502
      %v841 = vunpack.c.h.b16 %v502
      %v842 = vunpack.c.l.b16 %v503
      %v843 = vunpack.c.h.b16 %v503
      %v844 = vunpack.c.l.b16 %v504
      %v845 = vunpack.c.h.b16 %v504
      %v846 = vunpack.c.l.b16 %v505
      %v847 = vunpack.c.h.b16 %v505
      %v848 = vunpack.c.l.b16 %v506
      %v849 = vunpack.c.h.b16 %v506
      %v850 = vunpack.c.l.b16 %v507
      %v851 = vunpack.c.h.b16 %v507
      %v852 = vunpack.c.l.b16 %v508
      %v853 = vunpack.c.h.b16 %v508
      %v854 = vunpack.c.l.b16 %v509
      %v855 = vunpack.c.h.b16 %v509
      %v856 = vunpack.c.l.b16 %v510
      %v857 = vunpack.c.h.b16 %v510
      %v858 = vunpack.c.l.b16 %v511
      %v859 = vunpack.c.h.b16 %v511
      %v860 = vunpack.c.l.b16 %v512
      %v861 = vunpack.c.h.b16 %v512
      %v862 = vunpack.c.l.b16 %v513
      %v863 = vunpack.c.h.b16 %v513
      %v864 = vunpack.c.l.b16 %v514
      %v865 = vunpack.c.h.b16 %v514
      %v866 = vunpack.c.l.b16 %v515
      %v867 = vunpack.c.h.b16 %v515
      %v868 = vunpack.c.l.b16 %v516
      %v869 = vunpack.c.h.b16 %v516
      %v870 = vunpack.c.l.b16 %v517
      %v871 = vunpack.c.h.b16 %v517
      %v872 = vunpack.c.l.b16 %v518
      %v873 = vunpack.c.h.b16 %v518
      %v874 = vunpack.c.l.b16 %v519
      %v875 = vunpack.c.h.b16 %v519
      %v876 = vunpack.c.l.b16 %v520
      %v877 = vunpack.c.h.b16 %v520
      %v878 = vunpack.c.l.b16 %v521
      %v879 = vunpack.c.h.b16 %v521
      %v880 = vunpack.c.l.b16 %v522
      %v881 = vunpack.c.h.b16 %v522
      %v882 = vunpack.c.l.b16 %v523
      %v883 = vunpack.c.h.b16 %v523
      %v884 = vunpack.c.l.b16 %v524
      %v885 = vunpack.c.h.b16 %v524
      %v886 = vunpack.c.l.b16 %v525
      %v887 = vunpack.c.h.b16 %v525
      %v888 = vunpack.c.l.b16 %v526
      %v889 = vunpack.c.h.b16 %v526
      %v890 = vunpack.c.l.b16 %v527
      %v891 = vunpack.c.h.b16 %v527
      %v892 = vunpack.c.l.b16 %v528
      %v893 = vunpack.c.h.b16 %v528
      %v894 = vunpack.c.l.b16 %v529
      %v895 = vunpack.c.h.b16 %v529
      %v896 = vunpack.c.l.b16 %v530
      %v897 = vunpack.c.h.b16 %v530
      %v898 = vunpack.c.l.b16 %v531
      %v899 = vunpack.c.h.b16 %v531
      %v900 = vunpack.c.l.b16 %v532
      %v901 = vunpack.c.h.b16 %v532
      %v902 = vunpack.c.l.b16 %v533
      %v903 = vunpack.c.h.b16 %v533
      %v904 = vunpack.c.l.b16 %v534
      %v905 = vunpack.c.h.b16 %v534
      %v906 = vunpack.c.l.b16 %v535
      %v907 = vunpack.c.h.b16 %v535
      %v908 = vunpack.c.l.b16 %v536
      %v909 = vunpack.c.h.b16 %v536
      %v910 = vunpack.c.l.b16 %v537
      %v911 = vunpack.c.h.b16 %v537
      %v912 = vunpack.c.l.b16 %v538
      %v913 = vunpack.c.h.b16 %v538
      %v914 = vunpack.c.l.b16 %v539
      %v915 = vunpack.c.h.b16 %v539
      %v916 = vunpack.c.l.b16 %v540
      %v917 = vunpack.c.h.b16 %v540
      %v918 = vunpack.c.l.b16 %v541
      %v919 = vunpack.c.h.b16 %v541
      %v920 = vunpack.c.l.b16 %v542
      %v921 = vunpack.c.h.b16 %v542
      %v922 = vunpack.c.l.b16 %v543
      %v923 = vunpack.c.h.b16 %v543
      %v924 = vunpack.c.l.b16 %v544
      %v925 = vunpack.c.h.b16 %v544
      %v926 = vunpack.c.l.b16 %v545
      %v927 = vunpack.c.h.b16 %v545
      %v928 = vunpack.c.l.b16 %v546
      %v929 = vunpack.c.h.b16 %v546
      %v930 = vunpack.c.l.b16 %v547
      %v931 = vunpack.c.h.b16 %v547
      %v932 = vunpack.c.l.b16 %v548
      %v933 = vunpack.c.h.b16 %v548
      %v934 = vunpack.c.l.b16 %v549
      %v935 = vunpack.c.h.b16 %v549
      %v936 = vunpack.c.l.b16 %v550
      %v937 = vunpack.c.h.b16 %v550
      %v938 = vunpack.c.l.b16 %v551
      %v939 = vunpack.c.h.b16 %v551
      %v940 = vunpack.c.l.b16 %v552
      %v941 = vunpack.c.h.b16 %v552
      %v942 = vunpack.c.l.b16 %v553
      %v943 = vunpack.c.h.b16 %v553
      %v944 = vunpack.c.l.b16 %v554
      %v945 = vunpack.c.h.b16 %v554
      %v946 = vunpack.c.l.b16 %v555
      %v947 = vunpack.c.h.b16 %v555
      %v948 = vunpack.c.l.b16 %v556
      %v949 = vunpack.c.h.b16 %v556
      %v950 = vunpack.c.l.b16 %v557
      %v951 = vunpack.c.h.b16 %v557
      %v952 = vunpack.c.l.b16 %v558
      %v953 = vunpack.c.h.b16 %v558
      %v954 = vunpack.c.l.b16 %v559
      %v955 = vunpack.c.h.b16 %v559
      %v956 = vunpack.c.l.b16 %v560
      %v957 = vunpack.c.h.b16 %v560
      %v958 = vunpack.c.l.b16 %v561
      %v959 = vunpack.c.h.b16 %v561
      %v960 = vunpack.c.l.b16 %v562
      %v961 = vunpack.c.h.b16 %v562
      %v962 = vunpack.c.l.b16 %v563
      %v963 = vunpack.c.h.b16 %v563
      %v964 = vunpack.c.l.b16 %v564
      %v965 = vunpack.c.h.b16 %v564
      %v966 = vunpack.c.l.b16 %v565
      %v967 = vunpack.c.h.b16 %v565
      %v968 = vunpack.c.l.b16 %v566
      %v969 = vunpack.c.h.b16 %v566
      %v970 = vunpack.c.l.b16 %v567
      %v971 = vunpack.c.h.b16 %v567
      %v972 = vunpack.c.l.b16 %v568
      %v973 = vunpack.c.h.b16 %v568
      %v974 = vunpack.c.l.b16 %v569
      %v975 = vunpack.c.h.b16 %v569
      %v976 = vunpack.c.l.b16 %v570
      %v977 = vunpack.c.h.b16 %v570
      %v978 = vunpack.c.l.b16 %v571
      %v979 = vunpack.c.h.b16 %v571
      %v980 = vunpack.c.l.b16 %v572
      %v981 = vunpack.c.h.b16 %v572
      %v982 = vunpack.c.l.b16 %v573
      %v983 = vunpack.c.h.b16 %v573
      %v984 = vunpack.c.l.b16 %v574
      %v985 = vunpack.c.h.b16 %v574
      %v986 = vunpack.c.l.b16 %v575
      %v987 = vunpack.c.h.b16 %v575
      %v988 = vunpack.c.l.b16 %v576
      %v989 = vunpack.c.h.b16 %v576
      %v990 = vunpack.c.l.b16 %v577
      %v991 = vunpack.c.h.b16 %v577
      %v992 = vunpack.c.l.b16 %v578
      %v993 = vunpack.c.h.b16 %v578
      %v994 = vunpack.c.l.b16 %v579
      %v995 = vunpack.c.h.b16 %v579
      %v996 = vunpack.c.l.b16 %v580
      %v997 = vunpack.c.h.b16 %v580
      %v998 = vunpack.c.l.b16 %v581
      %v999 = vunpack.c.h.b16 %v581
      %v1000 = vunpack.c.l.b16 %v582
      %v1001 = vunpack.c.h.b16 %v582
      %v1002 = vunpack.c.l.b16 %v583
      %v1003 = vunpack.c.h.b16 %v583
      %v1004 = vunpack.c.l.b16 %v584
      %v1005 = vunpack.c.h.b16 %v584
      %v1006 = vunpack.c.l.b16 %v585
      %v1007 = vunpack.c.h.b16 %v585
      %v1008 = vunpack.c.l.b16 %v586
      %v1009 = vunpack.c.h.b16 %v586
      %v1010 = vunpack.c.l.b16 %v587
      %v1011 = vunpack.c.h.b16 %v587
      %v1012 = vpack.c.b16 %v758, %v756
      %v1013 = vpack.c.b16 %v759, %v757
      %v1014 = vpack.c.b16 %v762, %v760
      %v1015 = vpack.c.b16 %v763, %v761
      %v1016 = vpack.c.b16 %v766, %v764
      %v1017 = vpack.c.b16 %v767, %v765
      %v1018 = vpack.c.b16 %v770, %v768
      %v1019 = vpack.c.b16 %v771, %v769
      %v1020 = vpack.c.b16 %v774, %v772
      %v1021 = vpack.c.b16 %v775, %v773
      %v1022 = vpack.c.b16 %v778, %v776
      %v1023 = vpack.c.b16 %v779, %v777
      %v1024 = vpack.c.b16 %v782, %v780
      %v1025 = vpack.c.b16 %v783, %v781
      %v1026 = vpack.c.b16 %v786, %v784
      %v1027 = vpack.c.b16 %v787, %v785
      %v1028 = vpack.c.b16 %v790, %v788
      %v1029 = vpack.c.b16 %v791, %v789
      %v1030 = vpack.c.b16 %v794, %v792
      %v1031 = vpack.c.b16 %v795, %v793
      %v1032 = vpack.c.b16 %v798, %v796
      %v1033 = vpack.c.b16 %v799, %v797
      %v1034 = vpack.c.b16 %v802, %v800
      %v1035 = vpack.c.b16 %v803, %v801
      %v1036 = vpack.c.b16 %v806, %v804
      %v1037 = vpack.c.b16 %v807, %v805
      %v1038 = vpack.c.b16 %v810, %v808
      %v1039 = vpack.c.b16 %v811, %v809
      %v1040 = vpack.c.b16 %v814, %v812
      %v1041 = vpack.c.b16 %v815, %v813
      %v1042 = vpack.c.b16 %v818, %v816
      %v1043 = vpack.c.b16 %v819, %v817
      %v1044 = vpack.c.b16 %v822, %v820
      %v1045 = vpack.c.b16 %v823, %v821
      %v1046 = vpack.c.b16 %v826, %v824
      %v1047 = vpack.c.b16 %v827, %v825
      %v1048 = vpack.c.b16 %v830, %v828
      %v1049 = vpack.c.b16 %v831, %v829
      %v1050 = vpack.c.b16 %v834, %v832
      %v1051 = vpack.c.b16 %v835, %v833
      %v1052 = vpack.c.b16 %v838, %v836
      %v1053 = vpack.c.b16 %v839, %v837
      %v1054 = vpack.c.b16 %v842, %v840
      %v1055 = vpack.c.b16 %v843, %v841
      %v1056 = vpack.c.b16 %v846, %v844
      %v1057 = vpack.c.b16 %v847, %v845
      %v1058 = vpack.c.b16 %v850, %v848
      %v1059 = vpack.c.b16 %v851, %v849
      %v1060 = vpack.c.b16 %v854, %v852
      %v1061 = vpack.c.b16 %v855, %v853
      %v1062 = vpack.c.b16 %v858, %v856
      %v1063 = vpack.c.b16 %v859, %v857
      %v1064 = vpack.c.b16 %v862, %v860
      %v1065 = vpack.c.b16 %v863, %v861
      %v1066 = vpack.c.b16 %v866, %v864
      %v1067 = vpack.c.b16 %v867, %v865
      %v1068 = vpack.c.b16 %v870, %v868
      %v1069 = vpack.c.b16 %v871, %v869
      %v1070 = vpack.c.b16 %v874, %v872
      %v1071 = vpack.c.b16 %v875, %v873
      %v1072 = vpack.c.b16 %v878, %v876
      %v1073 = vpack.c.b16 %v879, %v877
      %v1074 = vpack.c.b16 %v882, %v880
      %v1075 = vpack.c.b16 %v883, %v881
      %v1076 = vpack.c.b16 %v886, %v884
      %v1077 = vpack.c.b16 %v887, %v885
      %v1078 = vpack.c.b16 %v890, %v888
      %v1079 = vpack.c.b16 %v891, %v889
      %v1080 = vpack.c.b16 %v894, %v892
      %v1081 = vpack.c.b16 %v895, %v893
      %v1082 = vpack.c.b16 %v898, %v896
      %v1083 = vpack.c.b16 %v899, %v897
      %v1084 = vpack.c.b16 %v902, %v900
      %v1085 = vpack.c.b16 %v903, %v901
      %v1086 = vpack.c.b16 %v906, %v904
      %v1087 = vpack.c.b16 %v907, %v905
      %v1088 = vpack.c.b16 %v910, %v908
      %v1089 = vpack.c.b16 %v911, %v909
      %v1090 = vpack.c.b16 %v914, %v912
      %v1091 = vpack.c.b16 %v915, %v913
      %v1092 = vpack.c.b16 %v918, %v916
      %v1093 = vpack.c.b16 %v919, %v917
      %v1094 = vpack.c.b16 %v922, %v920
      %v1095 = vpack.c.b16 %v923, %v921
      %v1096 = vpack.c.b16 %v926, %v924
      %v1097 = vpack.c.b16 %v927, %v925
      %v1098 = vpack.c.b16 %v930, %v928
      %v1099 = vpack.c.b16 %v931, %v929
      %v1100 = vpack.c.b16 %v934, %v932
      %v1101 = vpack.c.b16 %v935, %v933
      %v1102 = vpack.c.b16 %v938, %v936
      %v1103 = vpack.c.b16 %v939, %v937
      %v1104 = vpack.c.b16 %v942, %v940
      %v1105 = vpack.c.b16 %v943, %v941
      %v1106 = vpack.c.b16 %v946, %v944
      %v1107 = vpack.c.b16 %v947, %v945
      %v1108 = vpack.c.b16 %v950, %v948
      %v1109 = vpack.c.b16 %v951, %v949
      %v1110 = vpack.c.b16 %v954, %v952
      %v1111 = vpack.c.b16 %v955, %v953
      %v1112 = vpack.c.b16 %v958, %v956
      %v1113 = vpack.c.b16 %v959, %v957
      %v1114 = vpack.c.b16 %v962, %v960
      %v1115 = vpack.c.b16 %v963, %v961
      %v1116 = vpack.c.b16 %v966, %v964
      %v1117 = vpack.c.b16 %v967, %v965
      %v1118 = vpack.c.b16 %v970, %v968
      %v1119 = vpack.c.b16 %v971, %v969
      %v1120 = vpack.c.b16 %v974, %v972
      %v1121 = vpack.c.b16 %v975, %v973
      %v1122 = vpack.c.b16 %v978, %v976
      %v1123 = vpack.c.b16 %v979, %v977
      %v1124 = vpack.c.b16 %v982, %v980
      %v1125 = vpack.c.b16 %v983, %v981
      %v1126 = vpack.c.b16 %v986, %v984
      %v1127 = vpack.c.b16 %v987, %v985
      %v1128 = vpack.c.b16 %v990, %v988
      %v1129 = vpack.c.b16 %v991, %v989
      %v1130 = vpack.c.b16 %v994, %v992
      %v1131 = vpack.c.b16 %v995, %v993
      %v1132 = vpack.c.b16 %v998, %v996
      %v1133 = vpack.c.b16 %v999, %v997
      %v1134 = vpack.c.b16 %v1002, %v1000
      %v1135 = vpack.c.b16 %v1003, %v1001
      %v1136 = vpack.c.b16 %v1006, %v1004
      %v1137 = vpack.c.b16 %v1007, %v1005
      %v1138 = vpack.c.b16 %v1010, %v1008
      %v1139 = vpack.c.b16 %v1011, %v1009
      %1268 = vmatpush.bf16.msra.mxu0 %v1026
      %1269 = vmatpush.bf16.msra.mxu0 %v1024
      %1270 = vmatpush.bf16.msra.mxu0 %v1022
      %1271 = vmatpush.bf16.msra.mxu0 %v1020
      %1272 = vmatpush.bf16.msra.mxu0 %v1018
      %1273 = vmatpush.bf16.msra.mxu0 %v1016
      %1274 = vmatpush.bf16.msra.mxu0 %v1014
      %1275 = vmatpush.bf16.msra.mxu0 %v1012
      %1276 = vmatmul.bf16.gmra.mxu0 %v612
      %v1277 = vpop.f32.mrf.mxu0
      %v1278 = vadd.f32 0.0, %v1277
      %v1279 = vpop.f32.mrf.mxu0
      %v1280 = vadd.f32 0.0, %v1279
      %1281 = vdwg.mxu0
      %1282 = vmatpush.bf16.msra.mxu0 %v1042
      %1283 = vmatpush.bf16.msra.mxu0 %v1040
      %1284 = vmatpush.bf16.msra.mxu0 %v1038
      %1285 = vmatpush.bf16.msra.mxu0 %v1036
      %1286 = vmatpush.bf16.msra.mxu0 %v1034
      %1287 = vmatpush.bf16.msra.mxu0 %v1032
      %1288 = vmatpush.bf16.msra.mxu0 %v1030
      %1289 = vmatpush.bf16.msra.mxu0 %v1028
      %1290 = vmatmul.bf16.gmra.mxu0 %v613
      %v1291 = vpop.f32.mrf.mxu0
      %v1292 = vadd.f32 %v1278, %v1291
      %v1293 = vpop.f32.mrf.mxu0
      %v1294 = vadd.f32 %v1280, %v1293
      %1295 = vdwg.mxu0
      %1296 = vmatpush.bf16.msra.mxu0 %v1058
      %1297 = vmatpush.bf16.msra.mxu0 %v1056
      %1298 = vmatpush.bf16.msra.mxu0 %v1054
      %1299 = vmatpush.bf16.msra.mxu0 %v1052
      %1300 = vmatpush.bf16.msra.mxu0 %v1050
      %1301 = vmatpush.bf16.msra.mxu0 %v1048
      %1302 = vmatpush.bf16.msra.mxu0 %v1046
      %1303 = vmatpush.bf16.msra.mxu0 %v1044
      %1304 = vmatmul.bf16.gmra.mxu0 %v614
      %v1305 = vpop.f32.mrf.mxu0
      %v1306 = vadd.f32 %v1292, %v1305
      %v1307 = vpop.f32.mrf.mxu0
      %v1308 = vadd.f32 %v1294, %v1307
      %1309 = vdwg.mxu0
      %1310 = vmatpush.bf16.msra.mxu0 %v1074
      %1311 = vmatpush.bf16.msra.mxu0 %v1072
      %1312 = vmatpush.bf16.msra.mxu0 %v1070
      %1313 = vmatpush.bf16.msra.mxu0 %v1068
      %1314 = vmatpush.bf16.msra.mxu0 %v1066
      %1315 = vmatpush.bf16.msra.mxu0 %v1064
      %1316 = vmatpush.bf16.msra.mxu0 %v1062
      %1317 = vmatpush.bf16.msra.mxu0 %v1060
      %1318 = vmatmul.bf16.gmra.mxu0 %v615
      %v1319 = vpop.f32.mrf.mxu0
      %v1320 = vadd.f32 %v1306, %v1319
      %v1321 = vpop.f32.mrf.mxu0
      %v1322 = vadd.f32 %v1308, %v1321
      %1323 = vdwg.mxu0
      %1324 = vmatpush.bf16.msra.mxu0 %v1090
      %1325 = vmatpush.bf16.msra.mxu0 %v1088
      %1326 = vmatpush.bf16.msra.mxu0 %v1086
      %1327 = vmatpush.bf16.msra.mxu0 %v1084
      %1328 = vmatpush.bf16.msra.mxu0 %v1082
      %1329 = vmatpush.bf16.msra.mxu0 %v1080
      %1330 = vmatpush.bf16.msra.mxu0 %v1078
      %1331 = vmatpush.bf16.msra.mxu0 %v1076
      %1332 = vmatmul.bf16.gmra.mxu0 %v616
      %v1333 = vpop.f32.mrf.mxu0
      %v1334 = vadd.f32 %v1320, %v1333
      %v1335 = vpop.f32.mrf.mxu0
      %v1336 = vadd.f32 %v1322, %v1335
      %1337 = vdwg.mxu0
      %1338 = vmatpush.bf16.msra.mxu0 %v1106
      %1339 = vmatpush.bf16.msra.mxu0 %v1104
      %1340 = vmatpush.bf16.msra.mxu0 %v1102
      %1341 = vmatpush.bf16.msra.mxu0 %v1100
      %1342 = vmatpush.bf16.msra.mxu0 %v1098
      %1343 = vmatpush.bf16.msra.mxu0 %v1096
      %1344 = vmatpush.bf16.msra.mxu0 %v1094
      %1345 = vmatpush.bf16.msra.mxu0 %v1092
      %1346 = vmatmul.bf16.gmra.mxu0 %v617
      %v1347 = vpop.f32.mrf.mxu0
      %v1348 = vadd.f32 %v1334, %v1347
      %v1349 = vpop.f32.mrf.mxu0
      %v1350 = vadd.f32 %v1336, %v1349
      %1351 = vdwg.mxu0
      %1352 = vmatpush.bf16.msra.mxu0 %v1122
      %1353 = vmatpush.bf16.msra.mxu0 %v1120
      %1354 = vmatpush.bf16.msra.mxu0 %v1118
      %1355 = vmatpush.bf16.msra.mxu0 %v1116
      %1356 = vmatpush.bf16.msra.mxu0 %v1114
      %1357 = vmatpush.bf16.msra.mxu0 %v1112
      %1358 = vmatpush.bf16.msra.mxu0 %v1110
      %1359 = vmatpush.bf16.msra.mxu0 %v1108
      %1360 = vmatmul.bf16.gmra.mxu0 %v618
      %v1361 = vpop.f32.mrf.mxu0
      %v1362 = vadd.f32 %v1348, %v1361
      %v1363 = vpop.f32.mrf.mxu0
      %v1364 = vadd.f32 %v1350, %v1363
      %1365 = vdwg.mxu0
      %1366 = vmatpush.bf16.msra.mxu0 %v1138
      %1367 = vmatpush.bf16.msra.mxu0 %v1136
      %1368 = vmatpush.bf16.msra.mxu0 %v1134
      %1369 = vmatpush.bf16.msra.mxu0 %v1132
      %1370 = vmatpush.bf16.msra.mxu0 %v1130
      %1371 = vmatpush.bf16.msra.mxu0 %v1128
      %1372 = vmatpush.bf16.msra.mxu0 %v1126
      %1373 = vmatpush.bf16.msra.mxu0 %v1124
      %1374 = vmatmul.bf16.gmra.mxu0 %v619
      %v1375 = vpop.f32.mrf.mxu0
      %v1376 = vadd.f32 %v1362, %v1375
      %v1377 = vpop.f32.mrf.mxu0
      %v1378 = vadd.f32 %v1364, %v1377
      %1379 = vdwg.mxu0
      %1380 = vmatpush.bf16.msra.mxu0 %v1027
      %1381 = vmatpush.bf16.msra.mxu0 %v1025
      %1382 = vmatpush.bf16.msra.mxu0 %v1023
      %1383 = vmatpush.bf16.msra.mxu0 %v1021
      %1384 = vmatpush.bf16.msra.mxu0 %v1019
      %1385 = vmatpush.bf16.msra.mxu0 %v1017
      %1386 = vmatpush.bf16.msra.mxu0 %v1015
      %1387 = vmatpush.bf16.msra.mxu0 %v1013
      %1388 = vmatmul.bf16.gmra.mxu0 %v612
      %v1389 = vpop.f32.mrf.mxu0
      %v1390 = vadd.f32 0.0, %v1389
      %v1391 = vpop.f32.mrf.mxu0
      %v1392 = vadd.f32 0.0, %v1391
      %1393 = vdwg.mxu0
      %1394 = vmatpush.bf16.msra.mxu0 %v1043
      %1395 = vmatpush.bf16.msra.mxu0 %v1041
      %1396 = vmatpush.bf16.msra.mxu0 %v1039
      %1397 = vmatpush.bf16.msra.mxu0 %v1037
      %1398 = vmatpush.bf16.msra.mxu0 %v1035
      %1399 = vmatpush.bf16.msra.mxu0 %v1033
      %1400 = vmatpush.bf16.msra.mxu0 %v1031
      %1401 = vmatpush.bf16.msra.mxu0 %v1029
      %1402 = vmatmul.bf16.gmra.mxu0 %v613
      %v1403 = vpop.f32.mrf.mxu0
      %v1404 = vadd.f32 %v1390, %v1403
      %v1405 = vpop.f32.mrf.mxu0
      %v1406 = vadd.f32 %v1392, %v1405
      %1407 = vdwg.mxu0
      %1408 = vmatpush.bf16.msra.mxu0 %v1059
      %1409 = vmatpush.bf16.msra.mxu0 %v1057
      %1410 = vmatpush.bf16.msra.mxu0 %v1055
      %1411 = vmatpush.bf16.msra.mxu0 %v1053
      %1412 = vmatpush.bf16.msra.mxu0 %v1051
      %1413 = vmatpush.bf16.msra.mxu0 %v1049
      %1414 = vmatpush.bf16.msra.mxu0 %v1047
      %1415 = vmatpush.bf16.msra.mxu0 %v1045
      %1416 = vmatmul.bf16.gmra.mxu0 %v614
      %v1417 = vpop.f32.mrf.mxu0
      %v1418 = vadd.f32 %v1404, %v1417
      %v1419 = vpop.f32.mrf.mxu0
      %v1420 = vadd.f32 %v1406, %v1419
      %1421 = vdwg.mxu0
      %1422 = vmatpush.bf16.msra.mxu0 %v1075
      %1423 = vmatpush.bf16.msra.mxu0 %v1073
      %1424 = vmatpush.bf16.msra.mxu0 %v1071
      %1425 = vmatpush.bf16.msra.mxu0 %v1069
      %1426 = vmatpush.bf16.msra.mxu0 %v1067
      %1427 = vmatpush.bf16.msra.mxu0 %v1065
      %1428 = vmatpush.bf16.msra.mxu0 %v1063
      %1429 = vmatpush.bf16.msra.mxu0 %v1061
      %1430 = vmatmul.bf16.gmra.mxu0 %v615
      %v1431 = vpop.f32.mrf.mxu0
      %v1432 = vadd.f32 %v1418, %v1431
      %v1433 = vpop.f32.mrf.mxu0
      %v1434 = vadd.f32 %v1420, %v1433
      %1435 = vdwg.mxu0
      %1436 = vmatpush.bf16.msra.mxu0 %v1091
      %1437 = vmatpush.bf16.msra.mxu0 %v1089
      %1438 = vmatpush.bf16.msra.mxu0 %v1087
      %1439 = vmatpush.bf16.msra.mxu0 %v1085
      %1440 = vmatpush.bf16.msra.mxu0 %v1083
      %1441 = vmatpush.bf16.msra.mxu0 %v1081
      %1442 = vmatpush.bf16.msra.mxu0 %v1079
      %1443 = vmatpush.bf16.msra.mxu0 %v1077
      %1444 = vmatmul.bf16.gmra.mxu0 %v616
      %v1445 = vpop.f32.mrf.mxu0
      %v1446 = vadd.f32 %v1432, %v1445
      %v1447 = vpop.f32.mrf.mxu0
      %v1448 = vadd.f32 %v1434, %v1447
      %1449 = vdwg.mxu0
      %1450 = vmatpush.bf16.msra.mxu0 %v1107
      %1451 = vmatpush.bf16.msra.mxu0 %v1105
      %1452 = vmatpush.bf16.msra.mxu0 %v1103
      %1453 = vmatpush.bf16.msra.mxu0 %v1101
      %1454 = vmatpush.bf16.msra.mxu0 %v1099
      %1455 = vmatpush.bf16.msra.mxu0 %v1097
      %1456 = vmatpush.bf16.msra.mxu0 %v1095
      %1457 = vmatpush.bf16.msra.mxu0 %v1093
      %1458 = vmatmul.bf16.gmra.mxu0 %v617
      %v1459 = vpop.f32.mrf.mxu0
      %v1460 = vadd.f32 %v1446, %v1459
      %v1461 = vpop.f32.mrf.mxu0
      %v1462 = vadd.f32 %v1448, %v1461
      %1463 = vdwg.mxu0
      %1464 = vmatpush.bf16.msra.mxu0 %v1123
      %1465 = vmatpush.bf16.msra.mxu0 %v1121
      %1466 = vmatpush.bf16.msra.mxu0 %v1119
      %1467 = vmatpush.bf16.msra.mxu0 %v1117
      %1468 = vmatpush.bf16.msra.mxu0 %v1115
      %1469 = vmatpush.bf16.msra.mxu0 %v1113
      %1470 = vmatpush.bf16.msra.mxu0 %v1111
      %1471 = vmatpush.bf16.msra.mxu0 %v1109
      %1472 = vmatmul.bf16.gmra.mxu0 %v618
      %v1473 = vpop.f32.mrf.mxu0
      %v1474 = vadd.f32 %v1460, %v1473
      %v1475 = vpop.f32.mrf.mxu0
      %v1476 = vadd.f32 %v1462, %v1475
      %1477 = vdwg.mxu0
      %1478 = vmatpush.bf16.msra.mxu0 %v1139
      %1479 = vmatpush.bf16.msra.mxu0 %v1137
      %1480 = vmatpush.bf16.msra.mxu0 %v1135
      %1481 = vmatpush.bf16.msra.mxu0 %v1133
      %1482 = vmatpush.bf16.msra.mxu0 %v1131
      %1483 = vmatpush.bf16.msra.mxu0 %v1129
      %1484 = vmatpush.bf16.msra.mxu0 %v1127
      %1485 = vmatpush.bf16.msra.mxu0 %v1125
      %1486 = vmatmul.bf16.gmra.mxu0 %v619
      %v1487 = vpop.f32.mrf.mxu0
      %v1488 = vadd.f32 %v1474, %v1487
      %v1489 = vpop.f32.mrf.mxu0
      %v1490 = vadd.f32 %v1476, %v1489
      %1491 = vdwg.mxu0
      %v1496 = vunpack.c.l.b16 %v452
      %v1497 = vunpack.c.h.b16 %v452
      %v1498 = vunpack.c.l.b16 %v453
      %v1499 = vunpack.c.h.b16 %v453
      %v1500 = vunpack.c.l.b16 %v454
      %v1501 = vunpack.c.h.b16 %v454
      %v1502 = vunpack.c.l.b16 %v455
      %v1503 = vunpack.c.h.b16 %v455
      %v1504 = vpack.c.b16 %v1496, %v1496
      %v1505 = vpack.c.b16 %v1497, %v1497
      %v1506 = vpack.c.b16 %v1498, %v1498
      %v1507 = vpack.c.b16 %v1499, %v1499
      %v1508 = vpack.c.b16 %v1500, %v1500
      %v1509 = vpack.c.b16 %v1501, %v1501
      %v1510 = vpack.c.b16 %v1502, %v1502
      %v1511 = vpack.c.b16 %v1503, %v1503
      %v1512 = vrot.slane %v1504, 1
      %v1513 = vrot.slane %v1505, 1
      %v1514 = vrot.slane %v1506, 1
      %v1515 = vrot.slane %v1507, 1
      %v1516 = vrot.slane %v1508, 1
      %v1517 = vrot.slane %v1509, 1
      %v1518 = vrot.slane %v1510, 1
      %v1519 = vrot.slane %v1511, 1
      %1528 = vmatpush.bf16.msra.mxu0 %v1026
      %1529 = vmatpush.bf16.msra.mxu0 %v1024
      %1530 = vmatpush.bf16.msra.mxu0 %v1022
      %1531 = vmatpush.bf16.msra.mxu0 %v1020
      %1532 = vmatpush.bf16.msra.mxu0 %v1018
      %1533 = vmatpush.bf16.msra.mxu0 %v1016
      %1534 = vmatpush.bf16.msra.mxu0 %v1014
      %1535 = vmatpush.bf16.msra.mxu0 %v1012
      %1536 = vmatmul.bf16.gmra.mxu0 %v1512
      %v1537 = vpop.f32.mrf.mxu0
      %v1538 = vadd.f32 0.0, %v1537
      %v1539 = vpop.f32.mrf.mxu0
      %1540 = vdwg.mxu0
      %1541 = vmatpush.bf16.msra.mxu0 %v1042
      %1542 = vmatpush.bf16.msra.mxu0 %v1040
      %1543 = vmatpush.bf16.msra.mxu0 %v1038
      %1544 = vmatpush.bf16.msra.mxu0 %v1036
      %1545 = vmatpush.bf16.msra.mxu0 %v1034
      %1546 = vmatpush.bf16.msra.mxu0 %v1032
      %1547 = vmatpush.bf16.msra.mxu0 %v1030
      %1548 = vmatpush.bf16.msra.mxu0 %v1028
      %1549 = vmatmul.bf16.gmra.mxu0 %v1513
      %v1550 = vpop.f32.mrf.mxu0
      %v1551 = vadd.f32 %v1538, %v1550
      %v1552 = vpop.f32.mrf.mxu0
      %1553 = vdwg.mxu0
      %1554 = vmatpush.bf16.msra.mxu0 %v1058
      %1555 = vmatpush.bf16.msra.mxu0 %v1056
      %1556 = vmatpush.bf16.msra.mxu0 %v1054
      %1557 = vmatpush.bf16.msra.mxu0 %v1052
      %1558 = vmatpush.bf16.msra.mxu0 %v1050
      %1559 = vmatpush.bf16.msra.mxu0 %v1048
      %1560 = vmatpush.bf16.msra.mxu0 %v1046
      %1561 = vmatpush.bf16.msra.mxu0 %v1044
      %1562 = vmatmul.bf16.gmra.mxu0 %v1514
      %v1563 = vpop.f32.mrf.mxu0
      %v1564 = vadd.f32 %v1551, %v1563
      %v1565 = vpop.f32.mrf.mxu0
      %1566 = vdwg.mxu0
      %1567 = vmatpush.bf16.msra.mxu0 %v1074
      %1568 = vmatpush.bf16.msra.mxu0 %v1072
      %1569 = vmatpush.bf16.msra.mxu0 %v1070
      %1570 = vmatpush.bf16.msra.mxu0 %v1068
      %1571 = vmatpush.bf16.msra.mxu0 %v1066
      %1572 = vmatpush.bf16.msra.mxu0 %v1064
      %1573 = vmatpush.bf16.msra.mxu0 %v1062
      %1574 = vmatpush.bf16.msra.mxu0 %v1060
      %1575 = vmatmul.bf16.gmra.mxu0 %v1515
      %v1576 = vpop.f32.mrf.mxu0
      %v1577 = vadd.f32 %v1564, %v1576
      %v1578 = vpop.f32.mrf.mxu0
      %1579 = vdwg.mxu0
      %1580 = vmatpush.bf16.msra.mxu0 %v1090
      %1581 = vmatpush.bf16.msra.mxu0 %v1088
      %1582 = vmatpush.bf16.msra.mxu0 %v1086
      %1583 = vmatpush.bf16.msra.mxu0 %v1084
      %1584 = vmatpush.bf16.msra.mxu0 %v1082
      %1585 = vmatpush.bf16.msra.mxu0 %v1080
      %1586 = vmatpush.bf16.msra.mxu0 %v1078
      %1587 = vmatpush.bf16.msra.mxu0 %v1076
      %1588 = vmatmul.bf16.gmra.mxu0 %v1516
      %v1589 = vpop.f32.mrf.mxu0
      %v1590 = vadd.f32 %v1577, %v1589
      %v1591 = vpop.f32.mrf.mxu0
      %1592 = vdwg.mxu0
      %1593 = vmatpush.bf16.msra.mxu0 %v1106
      %1594 = vmatpush.bf16.msra.mxu0 %v1104
      %1595 = vmatpush.bf16.msra.mxu0 %v1102
      %1596 = vmatpush.bf16.msra.mxu0 %v1100
      %1597 = vmatpush.bf16.msra.mxu0 %v1098
      %1598 = vmatpush.bf16.msra.mxu0 %v1096
      %1599 = vmatpush.bf16.msra.mxu0 %v1094
      %1600 = vmatpush.bf16.msra.mxu0 %v1092
      %1601 = vmatmul.bf16.gmra.mxu0 %v1517
      %v1602 = vpop.f32.mrf.mxu0
      %v1603 = vadd.f32 %v1590, %v1602
      %v1604 = vpop.f32.mrf.mxu0
      %1605 = vdwg.mxu0
      %1606 = vmatpush.bf16.msra.mxu0 %v1122
      %1607 = vmatpush.bf16.msra.mxu0 %v1120
      %1608 = vmatpush.bf16.msra.mxu0 %v1118
      %1609 = vmatpush.bf16.msra.mxu0 %v1116
      %1610 = vmatpush.bf16.msra.mxu0 %v1114
      %1611 = vmatpush.bf16.msra.mxu0 %v1112
      %1612 = vmatpush.bf16.msra.mxu0 %v1110
      %1613 = vmatpush.bf16.msra.mxu0 %v1108
      %1614 = vmatmul.bf16.gmra.mxu0 %v1518
      %v1615 = vpop.f32.mrf.mxu0
      %v1616 = vadd.f32 %v1603, %v1615
      %v1617 = vpop.f32.mrf.mxu0
      %1618 = vdwg.mxu0
      %1619 = vmatpush.bf16.msra.mxu0 %v1138
      %1620 = vmatpush.bf16.msra.mxu0 %v1136
      %1621 = vmatpush.bf16.msra.mxu0 %v1134
      %1622 = vmatpush.bf16.msra.mxu0 %v1132
      %1623 = vmatpush.bf16.msra.mxu0 %v1130
      %1624 = vmatpush.bf16.msra.mxu0 %v1128
      %1625 = vmatpush.bf16.msra.mxu0 %v1126
      %1626 = vmatpush.bf16.msra.mxu0 %v1124
      %1627 = vmatmul.bf16.gmra.mxu0 %v1519
      %v1628 = vpop.f32.mrf.mxu0
      %v1629 = vadd.f32 %v1616, %v1628
      %v1630 = vpop.f32.mrf.mxu0
      %1631 = vdwg.mxu0
      %1632 = vmatpush.bf16.msra.mxu0 %v1027
      %1633 = vmatpush.bf16.msra.mxu0 %v1025
      %1634 = vmatpush.bf16.msra.mxu0 %v1023
      %1635 = vmatpush.bf16.msra.mxu0 %v1021
      %1636 = vmatpush.bf16.msra.mxu0 %v1019
      %1637 = vmatpush.bf16.msra.mxu0 %v1017
      %1638 = vmatpush.bf16.msra.mxu0 %v1015
      %1639 = vmatpush.bf16.msra.mxu0 %v1013
      %1640 = vmatmul.bf16.gmra.mxu0 %v1512
      %v1641 = vpop.f32.mrf.mxu0
      %v1642 = vadd.f32 0.0, %v1641
      %v1643 = vpop.f32.mrf.mxu0
      %1644 = vdwg.mxu0
      %1645 = vmatpush.bf16.msra.mxu0 %v1043
      %1646 = vmatpush.bf16.msra.mxu0 %v1041
      %1647 = vmatpush.bf16.msra.mxu0 %v1039
      %1648 = vmatpush.bf16.msra.mxu0 %v1037
      %1649 = vmatpush.bf16.msra.mxu0 %v1035
      %1650 = vmatpush.bf16.msra.mxu0 %v1033
      %1651 = vmatpush.bf16.msra.mxu0 %v1031
      %1652 = vmatpush.bf16.msra.mxu0 %v1029
      %1653 = vmatmul.bf16.gmra.mxu0 %v1513
      %v1654 = vpop.f32.mrf.mxu0
      %v1655 = vadd.f32 %v1642, %v1654
      %v1656 = vpop.f32.mrf.mxu0
      %1657 = vdwg.mxu0
      %1658 = vmatpush.bf16.msra.mxu0 %v1059
      %1659 = vmatpush.bf16.msra.mxu0 %v1057
      %1660 = vmatpush.bf16.msra.mxu0 %v1055
      %1661 = vmatpush.bf16.msra.mxu0 %v1053
      %1662 = vmatpush.bf16.msra.mxu0 %v1051
      %1663 = vmatpush.bf16.msra.mxu0 %v1049
      %1664 = vmatpush.bf16.msra.mxu0 %v1047
      %1665 = vmatpush.bf16.msra.mxu0 %v1045
      %1666 = vmatmul.bf16.gmra.mxu0 %v1514
      %v1667 = vpop.f32.mrf.mxu0
      %v1668 = vadd.f32 %v1655, %v1667
      %v1669 = vpop.f32.mrf.mxu0
      %1670 = vdwg.mxu0
      %1671 = vmatpush.bf16.msra.mxu0 %v1075
      %1672 = vmatpush.bf16.msra.mxu0 %v1073
      %1673 = vmatpush.bf16.msra.mxu0 %v1071
      %1674 = vmatpush.bf16.msra.mxu0 %v1069
      %1675 = vmatpush.bf16.msra.mxu0 %v1067
      %1676 = vmatpush.bf16.msra.mxu0 %v1065
      %1677 = vmatpush.bf16.msra.mxu0 %v1063
      %1678 = vmatpush.bf16.msra.mxu0 %v1061
      %1679 = vmatmul.bf16.gmra.mxu0 %v1515
      %v1680 = vpop.f32.mrf.mxu0
      %v1681 = vadd.f32 %v1668, %v1680
      %v1682 = vpop.f32.mrf.mxu0
      %1683 = vdwg.mxu0
      %1684 = vmatpush.bf16.msra.mxu0 %v1091
      %1685 = vmatpush.bf16.msra.mxu0 %v1089
      %1686 = vmatpush.bf16.msra.mxu0 %v1087
      %1687 = vmatpush.bf16.msra.mxu0 %v1085
      %1688 = vmatpush.bf16.msra.mxu0 %v1083
      %1689 = vmatpush.bf16.msra.mxu0 %v1081
      %1690 = vmatpush.bf16.msra.mxu0 %v1079
      %1691 = vmatpush.bf16.msra.mxu0 %v1077
      %1692 = vmatmul.bf16.gmra.mxu0 %v1516
      %v1693 = vpop.f32.mrf.mxu0
      %v1694 = vadd.f32 %v1681, %v1693
      %v1695 = vpop.f32.mrf.mxu0
      %1696 = vdwg.mxu0
      %1697 = vmatpush.bf16.msra.mxu0 %v1107
      %1698 = vmatpush.bf16.msra.mxu0 %v1105
      %1699 = vmatpush.bf16.msra.mxu0 %v1103
      %1700 = vmatpush.bf16.msra.mxu0 %v1101
      %1701 = vmatpush.bf16.msra.mxu0 %v1099
      %1702 = vmatpush.bf16.msra.mxu0 %v1097
      %1703 = vmatpush.bf16.msra.mxu0 %v1095
      %1704 = vmatpush.bf16.msra.mxu0 %v1093
      %1705 = vmatmul.bf16.gmra.mxu0 %v1517
      %v1706 = vpop.f32.mrf.mxu0
      %v1707 = vadd.f32 %v1694, %v1706
      %v1708 = vpop.f32.mrf.mxu0
      %1709 = vdwg.mxu0
      %1710 = vmatpush.bf16.msra.mxu0 %v1123
      %1711 = vmatpush.bf16.msra.mxu0 %v1121
      %1712 = vmatpush.bf16.msra.mxu0 %v1119
      %1713 = vmatpush.bf16.msra.mxu0 %v1117
      %1714 = vmatpush.bf16.msra.mxu0 %v1115
      %1715 = vmatpush.bf16.msra.mxu0 %v1113
      %1716 = vmatpush.bf16.msra.mxu0 %v1111
      %1717 = vmatpush.bf16.msra.mxu0 %v1109
      %1718 = vmatmul.bf16.gmra.mxu0 %v1518
      %v1719 = vpop.f32.mrf.mxu0
      %v1720 = vadd.f32 %v1707, %v1719
      %v1721 = vpop.f32.mrf.mxu0
      %1722 = vdwg.mxu0
      %1723 = vmatpush.bf16.msra.mxu0 %v1139
      %1724 = vmatpush.bf16.msra.mxu0 %v1137
      %1725 = vmatpush.bf16.msra.mxu0 %v1135
      %1726 = vmatpush.bf16.msra.mxu0 %v1133
      %1727 = vmatpush.bf16.msra.mxu0 %v1131
      %1728 = vmatpush.bf16.msra.mxu0 %v1129
      %1729 = vmatpush.bf16.msra.mxu0 %v1127
      %1730 = vmatpush.bf16.msra.mxu0 %v1125
      %1731 = vmatmul.bf16.gmra.mxu0 %v1519
      %v1732 = vpop.f32.mrf.mxu0
      %v1733 = vadd.f32 %v1720, %v1732
      %v1734 = vpop.f32.mrf.mxu0
      %1735 = vdwg.mxu0
      %v1740 = vunpack.c.l.b16 %v456
      %v1741 = vunpack.c.h.b16 %v456
      %v1742 = vunpack.c.l.b16 %v457
      %v1743 = vunpack.c.h.b16 %v457
      %v1744 = vunpack.c.l.b16 %v458
      %v1745 = vunpack.c.h.b16 %v458
      %v1746 = vunpack.c.l.b16 %v459
      %v1747 = vunpack.c.h.b16 %v459
      %v1748 = vpack.c.b16 %v1740, %v1740
      %v1749 = vpack.c.b16 %v1741, %v1741
      %v1750 = vpack.c.b16 %v1742, %v1742
      %v1751 = vpack.c.b16 %v1743, %v1743
      %v1752 = vpack.c.b16 %v1744, %v1744
      %v1753 = vpack.c.b16 %v1745, %v1745
      %v1754 = vpack.c.b16 %v1746, %v1746
      %v1755 = vpack.c.b16 %v1747, %v1747
      %1764 = vmatpush.bf16.msra.mxu0 %v1026
      %1765 = vmatpush.bf16.msra.mxu0 %v1024
      %1766 = vmatpush.bf16.msra.mxu0 %v1022
      %1767 = vmatpush.bf16.msra.mxu0 %v1020
      %1768 = vmatpush.bf16.msra.mxu0 %v1018
      %1769 = vmatpush.bf16.msra.mxu0 %v1016
      %1770 = vmatpush.bf16.msra.mxu0 %v1014
      %1771 = vmatpush.bf16.msra.mxu0 %v1012
      %1772 = vmatmul.bf16.gmra.mxu0 %v1748
      %v1773 = vpop.f32.mrf.mxu0
      %v1774 = vadd.f32 0.0, %v1773
      %v1775 = vpop.f32.mrf.mxu0
      %1776 = vdwg.mxu0
      %1777 = vmatpush.bf16.msra.mxu0 %v1042
      %1778 = vmatpush.bf16.msra.mxu0 %v1040
      %1779 = vmatpush.bf16.msra.mxu0 %v1038
      %1780 = vmatpush.bf16.msra.mxu0 %v1036
      %1781 = vmatpush.bf16.msra.mxu0 %v1034
      %1782 = vmatpush.bf16.msra.mxu0 %v1032
      %1783 = vmatpush.bf16.msra.mxu0 %v1030
      %1784 = vmatpush.bf16.msra.mxu0 %v1028
      %1785 = vmatmul.bf16.gmra.mxu0 %v1749
      %v1786 = vpop.f32.mrf.mxu0
      %v1787 = vadd.f32 %v1774, %v1786
      %v1788 = vpop.f32.mrf.mxu0
      %1789 = vdwg.mxu0
      %1790 = vmatpush.bf16.msra.mxu0 %v1058
      %1791 = vmatpush.bf16.msra.mxu0 %v1056
      %1792 = vmatpush.bf16.msra.mxu0 %v1054
      %1793 = vmatpush.bf16.msra.mxu0 %v1052
      %1794 = vmatpush.bf16.msra.mxu0 %v1050
      %1795 = vmatpush.bf16.msra.mxu0 %v1048
      %1796 = vmatpush.bf16.msra.mxu0 %v1046
      %1797 = vmatpush.bf16.msra.mxu0 %v1044
      %1798 = vmatmul.bf16.gmra.mxu0 %v1750
      %v1799 = vpop.f32.mrf.mxu0
      %v1800 = vadd.f32 %v1787, %v1799
      %v1801 = vpop.f32.mrf.mxu0
      %1802 = vdwg.mxu0
      %1803 = vmatpush.bf16.msra.mxu0 %v1074
      %1804 = vmatpush.bf16.msra.mxu0 %v1072
      %1805 = vmatpush.bf16.msra.mxu0 %v1070
      %1806 = vmatpush.bf16.msra.mxu0 %v1068
      %1807 = vmatpush.bf16.msra.mxu0 %v1066
      %1808 = vmatpush.bf16.msra.mxu0 %v1064
      %1809 = vmatpush.bf16.msra.mxu0 %v1062
      %1810 = vmatpush.bf16.msra.mxu0 %v1060
      %1811 = vmatmul.bf16.gmra.mxu0 %v1751
      %v1812 = vpop.f32.mrf.mxu0
      %v1813 = vadd.f32 %v1800, %v1812
      %v1814 = vpop.f32.mrf.mxu0
      %1815 = vdwg.mxu0
      %1816 = vmatpush.bf16.msra.mxu0 %v1090
      %1817 = vmatpush.bf16.msra.mxu0 %v1088
      %1818 = vmatpush.bf16.msra.mxu0 %v1086
      %1819 = vmatpush.bf16.msra.mxu0 %v1084
      %1820 = vmatpush.bf16.msra.mxu0 %v1082
      %1821 = vmatpush.bf16.msra.mxu0 %v1080
      %1822 = vmatpush.bf16.msra.mxu0 %v1078
      %1823 = vmatpush.bf16.msra.mxu0 %v1076
      %1824 = vmatmul.bf16.gmra.mxu0 %v1752
      %v1825 = vpop.f32.mrf.mxu0
      %v1826 = vadd.f32 %v1813, %v1825
      %v1827 = vpop.f32.mrf.mxu0
      %1828 = vdwg.mxu0
      %1829 = vmatpush.bf16.msra.mxu0 %v1106
      %1830 = vmatpush.bf16.msra.mxu0 %v1104
      %1831 = vmatpush.bf16.msra.mxu0 %v1102
      %1832 = vmatpush.bf16.msra.mxu0 %v1100
      %1833 = vmatpush.bf16.msra.mxu0 %v1098
      %1834 = vmatpush.bf16.msra.mxu0 %v1096
      %1835 = vmatpush.bf16.msra.mxu0 %v1094
      %1836 = vmatpush.bf16.msra.mxu0 %v1092
      %1837 = vmatmul.bf16.gmra.mxu0 %v1753
      %v1838 = vpop.f32.mrf.mxu0
      %v1839 = vadd.f32 %v1826, %v1838
      %v1840 = vpop.f32.mrf.mxu0
      %1841 = vdwg.mxu0
      %1842 = vmatpush.bf16.msra.mxu0 %v1122
      %1843 = vmatpush.bf16.msra.mxu0 %v1120
      %1844 = vmatpush.bf16.msra.mxu0 %v1118
      %1845 = vmatpush.bf16.msra.mxu0 %v1116
      %1846 = vmatpush.bf16.msra.mxu0 %v1114
      %1847 = vmatpush.bf16.msra.mxu0 %v1112
      %1848 = vmatpush.bf16.msra.mxu0 %v1110
      %1849 = vmatpush.bf16.msra.mxu0 %v1108
      %1850 = vmatmul.bf16.gmra.mxu0 %v1754
      %v1851 = vpop.f32.mrf.mxu0
      %v1852 = vadd.f32 %v1839, %v1851
      %v1853 = vpop.f32.mrf.mxu0
      %1854 = vdwg.mxu0
      %1855 = vmatpush.bf16.msra.mxu0 %v1138
      %1856 = vmatpush.bf16.msra.mxu0 %v1136
      %1857 = vmatpush.bf16.msra.mxu0 %v1134
      %1858 = vmatpush.bf16.msra.mxu0 %v1132
      %1859 = vmatpush.bf16.msra.mxu0 %v1130
      %1860 = vmatpush.bf16.msra.mxu0 %v1128
      %1861 = vmatpush.bf16.msra.mxu0 %v1126
      %1862 = vmatpush.bf16.msra.mxu0 %v1124
      %1863 = vmatmul.bf16.gmra.mxu0 %v1755
      %v1864 = vpop.f32.mrf.mxu0
      %v1865 = vadd.f32 %v1852, %v1864
      %v1866 = vpop.f32.mrf.mxu0
      %1867 = vdwg.mxu0
      %1868 = vmatpush.bf16.msra.mxu0 %v1027
      %1869 = vmatpush.bf16.msra.mxu0 %v1025
      %1870 = vmatpush.bf16.msra.mxu0 %v1023
      %1871 = vmatpush.bf16.msra.mxu0 %v1021
      %1872 = vmatpush.bf16.msra.mxu0 %v1019
      %1873 = vmatpush.bf16.msra.mxu0 %v1017
      %1874 = vmatpush.bf16.msra.mxu0 %v1015
      %1875 = vmatpush.bf16.msra.mxu0 %v1013
      %1876 = vmatmul.bf16.gmra.mxu0 %v1748
      %v1877 = vpop.f32.mrf.mxu0
      %v1878 = vadd.f32 0.0, %v1877
      %v1879 = vpop.f32.mrf.mxu0
      %1880 = vdwg.mxu0
      %1881 = vmatpush.bf16.msra.mxu0 %v1043
      %1882 = vmatpush.bf16.msra.mxu0 %v1041
      %1883 = vmatpush.bf16.msra.mxu0 %v1039
      %1884 = vmatpush.bf16.msra.mxu0 %v1037
      %1885 = vmatpush.bf16.msra.mxu0 %v1035
      %1886 = vmatpush.bf16.msra.mxu0 %v1033
      %1887 = vmatpush.bf16.msra.mxu0 %v1031
      %1888 = vmatpush.bf16.msra.mxu0 %v1029
      %1889 = vmatmul.bf16.gmra.mxu0 %v1749
      %v1890 = vpop.f32.mrf.mxu0
      %v1891 = vadd.f32 %v1878, %v1890
      %v1892 = vpop.f32.mrf.mxu0
      %1893 = vdwg.mxu0
      %1894 = vmatpush.bf16.msra.mxu0 %v1059
      %1895 = vmatpush.bf16.msra.mxu0 %v1057
      %1896 = vmatpush.bf16.msra.mxu0 %v1055
      %1897 = vmatpush.bf16.msra.mxu0 %v1053
      %1898 = vmatpush.bf16.msra.mxu0 %v1051
      %1899 = vmatpush.bf16.msra.mxu0 %v1049
      %1900 = vmatpush.bf16.msra.mxu0 %v1047
      %1901 = vmatpush.bf16.msra.mxu0 %v1045
      %1902 = vmatmul.bf16.gmra.mxu0 %v1750
      %v1903 = vpop.f32.mrf.mxu0
      %v1904 = vadd.f32 %v1891, %v1903
      %v1905 = vpop.f32.mrf.mxu0
      %1906 = vdwg.mxu0
      %1907 = vmatpush.bf16.msra.mxu0 %v1075
      %1908 = vmatpush.bf16.msra.mxu0 %v1073
      %1909 = vmatpush.bf16.msra.mxu0 %v1071
      %1910 = vmatpush.bf16.msra.mxu0 %v1069
      %1911 = vmatpush.bf16.msra.mxu0 %v1067
      %1912 = vmatpush.bf16.msra.mxu0 %v1065
      %1913 = vmatpush.bf16.msra.mxu0 %v1063
      %1914 = vmatpush.bf16.msra.mxu0 %v1061
      %1915 = vmatmul.bf16.gmra.mxu0 %v1751
      %v1916 = vpop.f32.mrf.mxu0
      %v1917 = vadd.f32 %v1904, %v1916
      %v1918 = vpop.f32.mrf.mxu0
      %1919 = vdwg.mxu0
      %1920 = vmatpush.bf16.msra.mxu0 %v1091
      %1921 = vmatpush.bf16.msra.mxu0 %v1089
      %1922 = vmatpush.bf16.msra.mxu0 %v1087
      %1923 = vmatpush.bf16.msra.mxu0 %v1085
      %1924 = vmatpush.bf16.msra.mxu0 %v1083
      %1925 = vmatpush.bf16.msra.mxu0 %v1081
      %1926 = vmatpush.bf16.msra.mxu0 %v1079
      %1927 = vmatpush.bf16.msra.mxu0 %v1077
      %1928 = vmatmul.bf16.gmra.mxu0 %v1752
      %v1929 = vpop.f32.mrf.mxu0
      %v1930 = vadd.f32 %v1917, %v1929
      %v1931 = vpop.f32.mrf.mxu0
      %1932 = vdwg.mxu0
      %1933 = vmatpush.bf16.msra.mxu0 %v1107
      %1934 = vmatpush.bf16.msra.mxu0 %v1105
      %1935 = vmatpush.bf16.msra.mxu0 %v1103
      %1936 = vmatpush.bf16.msra.mxu0 %v1101
      %1937 = vmatpush.bf16.msra.mxu0 %v1099
      %1938 = vmatpush.bf16.msra.mxu0 %v1097
      %1939 = vmatpush.bf16.msra.mxu0 %v1095
      %1940 = vmatpush.bf16.msra.mxu0 %v1093
      %1941 = vmatmul.bf16.gmra.mxu0 %v1753
      %v1942 = vpop.f32.mrf.mxu0
      %v1943 = vadd.f32 %v1930, %v1942
      %v1944 = vpop.f32.mrf.mxu0
      %1945 = vdwg.mxu0
      %1946 = vmatpush.bf16.msra.mxu0 %v1123
      %1947 = vmatpush.bf16.msra.mxu0 %v1121
      %1948 = vmatpush.bf16.msra.mxu0 %v1119
      %1949 = vmatpush.bf16.msra.mxu0 %v1117
      %1950 = vmatpush.bf16.msra.mxu0 %v1115
      %1951 = vmatpush.bf16.msra.mxu0 %v1113
      %1952 = vmatpush.bf16.msra.mxu0 %v1111
      %1953 = vmatpush.bf16.msra.mxu0 %v1109
      %1954 = vmatmul.bf16.gmra.mxu0 %v1754
      %v1955 = vpop.f32.mrf.mxu0
      %v1956 = vadd.f32 %v1943, %v1955
      %v1957 = vpop.f32.mrf.mxu0
      %1958 = vdwg.mxu0
      %1959 = vmatpush.bf16.msra.mxu0 %v1139
      %1960 = vmatpush.bf16.msra.mxu0 %v1137
      %1961 = vmatpush.bf16.msra.mxu0 %v1135
      %1962 = vmatpush.bf16.msra.mxu0 %v1133
      %1963 = vmatpush.bf16.msra.mxu0 %v1131
      %1964 = vmatpush.bf16.msra.mxu0 %v1129
      %1965 = vmatpush.bf16.msra.mxu0 %v1127
      %1966 = vmatpush.bf16.msra.mxu0 %v1125
      %1967 = vmatmul.bf16.gmra.mxu0 %v1755
      %v1968 = vpop.f32.mrf.mxu0
      %v1969 = vadd.f32 %v1956, %v1968
      %v1970 = vpop.f32.mrf.mxu0
      %1971 = vdwg.mxu0
      %p1972 = scmp.gt.s32.totalorder %s23, 0
      %s1973 = scalar_select %p1972, 1, 0
      %v1974 = vstv %s1973
      %vm1975 = vcmp.eq.s32.totalorder %v1974, 1
      %v1976 = vsel %vm1975, %v1629, 0.0
      %v1977 = vsel %vm1975, %v1733, 0.0
      %v1978 = vlaneseq
      %v1979 = vshrl.u32 %v1978, 7
      %s1980 = sadd.s32 %s443, 16
      %v1981 = vstv %s1980
      %v1982 = vadd.s32 %v1981, %v1979
      %vm1983 = vcmp.lt.s32.totalorder %v1982, 16
      %v1984 = vsel %vm1983, 1, 0
      %vm1985 = vcmp.eq.s32.totalorder %v1984, 1
      %v1986 = vsel %vm1985, %v1865, 0.0
      %v1987 = vsel %vm1985, %v1969, 0.0
      %vm1990 = vcmask 1045504
      %v1991 = vrot.slane %v1376, 2
      %v1992 = vrot.slane %v1378, 2
      %v1993 = vsel %vm1990, %v1991, %v1992
      %v1997 = vsel %vm1990, %v1976, %v1991
      %v1999 = vrot.slane %v1976, 1
      %vm2001 = vcmask 1044480
      %v2002 = vrot.slane %v1376, 3
      %v2003 = vrot.slane %v1378, 3
      %v2004 = vsel %vm2001, %v2002, %v2003
      %v2008 = vrot.slane %v1986, 3
      %v2010 = vsel %vm2001, %v1999, %v2002
      %v2011 = vsel %vm2001, %v2003, %v2008
      %2014 = vrot.lane.b32.xlu0 %v2010, 96
      %v2015 = vpop.permute.xlu0 %2014
      %2016 = vrot.lane.b32.xlu0 %v2004, 96
      %v2017 = vpop.permute.xlu0 %2016
      %2018 = vrot.lane.b32.xlu0 %v2011, 96
      %v2019 = vpop.permute.xlu0 %2018
      %v2023 = vadd.f32 %v1997, %v2015
      %v2024 = vadd.f32 %v1993, %v2017
      %v2025 = vadd.f32 %v1992, %v2019
      %v2026 = vrot.slane %v1976, 2
      %vm2028 = vcmask 1043456
      %v2029 = vrot.slane %v1376, 4
      %v2030 = vrot.slane %v1378, 4
      %v2031 = vsel %vm2028, %v2029, %v2030
      %v2034 = vrot.slane %v1986, 4
      %v2036 = vsel %vm2028, %v2026, %v2029
      %v2037 = vsel %vm2028, %v2030, %v2034
      %2040 = vrot.lane.b32.xlu0 %v2036, 64
      %v2041 = vpop.permute.xlu0 %2040
      %2042 = vrot.lane.b32.xlu0 %v2031, 64
      %v2043 = vpop.permute.xlu0 %2042
      %2044 = vrot.lane.b32.xlu0 %v2037, 64
      %v2045 = vpop.permute.xlu0 %2044
      %v2049 = vadd.f32 %v2023, %v2041
      %v2050 = vadd.f32 %v2024, %v2043
      %v2051 = vadd.f32 %v2025, %v2045
      %v2052 = vrot.slane %v1976, 3
      %vm2054 = vcmask 1042432
      %v2055 = vrot.slane %v1376, 5
      %v2056 = vrot.slane %v1378, 5
      %v2057 = vsel %vm2054, %v2055, %v2056
      %v2060 = vrot.slane %v1986, 5
      %v2062 = vsel %vm2054, %v2052, %v2055
      %v2063 = vsel %vm2054, %v2056, %v2060
      %2066 = vrot.lane.b32.xlu0 %v2062, 32
      %v2067 = vpop.permute.xlu0 %2066
      %2068 = vrot.lane.b32.xlu0 %v2057, 32
      %v2069 = vpop.permute.xlu0 %2068
      %2070 = vrot.lane.b32.xlu0 %v2063, 32
      %v2071 = vpop.permute.xlu0 %2070
      %v2075 = vadd.f32 %v2049, %v2067
      %v2076 = vadd.f32 %v2050, %v2069
      %v2077 = vadd.f32 %v2051, %v2071
      %v2079 = vrot.slane %v1977, 4
      %vm2083 = vcmask 1041408
      %v2084 = vrot.slane %v1488, 6
      %v2085 = vrot.slane %v1490, 6
      %v2086 = vsel %vm2083, %v2084, %v2085
      %v2091 = vrot.slane %v1987, 6
      %v2093 = vsel %vm2083, %v2079, %v2084
      %v2094 = vsel %vm2083, %v2085, %v2091
      %v2095 = vadd.f32 %v2075, %v2093
      %v2096 = vadd.f32 %v2076, %v2086
      %v2097 = vadd.f32 %v2077, %v2094
      %v2098 = vrot.slane %v1977, 5
      %vm2100 = vcmask 1040384
      %v2101 = vrot.slane %v1488, 7
      %v2102 = vrot.slane %v1490, 7
      %v2103 = vsel %vm2100, %v2101, %v2102
      %v2106 = vrot.slane %v1987, 7
      %v2108 = vsel %vm2100, %v2098, %v2101
      %v2109 = vsel %vm2100, %v2102, %v2106
      %2112 = vrot.lane.b32.xlu0 %v2108, 96
      %v2113 = vpop.permute.xlu0 %2112
      %2114 = vrot.lane.b32.xlu0 %v2103, 96
      %v2115 = vpop.permute.xlu0 %2114
      %2116 = vrot.lane.b32.xlu0 %v2109, 96
      %v2117 = vpop.permute.xlu0 %2116
      %v2121 = vadd.f32 %v2095, %v2113
      %v2122 = vadd.f32 %v2096, %v2115
      %v2123 = vadd.f32 %v2097, %v2117
      %2124 = vrot.lane.b32.xlu0 %v1488, 64
      %v2125 = vpop.permute.xlu0 %2124
      %2126 = vrot.lane.b32.xlu0 %v1490, 64
      %v2127 = vpop.permute.xlu0 %2126
      %2128 = vrot.lane.b32.xlu0 %v1987, 64
      %v2129 = vpop.permute.xlu0 %2128
      %v2133 = vadd.f32 %v2121, %v2125
      %v2134 = vadd.f32 %v2122, %v2127
      %v2135 = vadd.f32 %v2123, %v2129
      %v2136 = vld [vmem:[%s4] sm:$0x1]
      %v2138 = vperm.slane %v2136, 0
      %v2140 = vadd.f32 %v2133, %v2138
      %v2141 = vadd.f32 %v2134, %v2138
      %v2142 = vadd.f32 %v2135, %v2138
      %v2143 = vmax.f32 %v2140, 0.0
      %v2144 = vmax.f32 %v2141, 0.0
      %v2145 = vmax.f32 %v2142, 0.0
      %v2146 = vadd.s32 %v1979, 8
      %v2147 = vadd.s32 %v1979, 16
      %s2148 = ssub.s32 %s443, 3
      %v2149 = vstv %s2148
      %v2150 = vadd.s32 %v2149, %v1979
      %v2151 = vadd.s32 %v2149, %v2146
      %v2152 = vadd.s32 %v2149, %v2147
      %vm2153 = vcmp.ge.s32.totalorder %v2150, 0
      %vm2154 = vcmp.ge.s32.totalorder %v2151, 0
      %vm2155 = vcmp.ge.s32.totalorder %v2152, 0
      %vm2156 = vcmp.lt.s32.totalorder %v2150, 16
      %vm2157 = vcmp.lt.s32.totalorder %v2151, 16
      %vm2158 = vcmp.lt.s32.totalorder %v2152, 16
      %vm2159 = vmand %vm2153, %vm2156
      %vm2160 = vmand %vm2154, %vm2157
      %vm2161 = vmand %vm2155, %vm2158
      %v2162 = vsel %vm2159, 1, 0
      %v2163 = vsel %vm2160, 1, 0
      %v2164 = vsel %vm2161, 1, 0
      %vm2165 = vcmp.eq.s32.totalorder %v2162, 1
      %vm2166 = vcmp.eq.s32.totalorder %v2163, 1
      %vm2167 = vcmp.eq.s32.totalorder %v2164, 1
      %v2168 = vsel %vm2165, %v2143, 0.0
      %v2169 = vsel %vm2166, %v2144, 0.0
      %v2170 = vsel %vm2167, %v2145, 0.0
      %v2171 = vpack.c.bf16 %v2169, %v2168
      %v2172 = vpack.c.bf16 %v2170, %v2170
      %v2173 = vld [vmem:[%s5] sm:$0xff]
      %v2174 = vld [vmem:[%s5 + $0x8] sm:$0xff]
      %v2175 = vld [vmem:[%s5 + $0x10] sm:$0xff]
      %v2176 = vld [vmem:[%s5 + $0x18] sm:$0xff]
      %v2181 = vunpack.c.l.b16 %v2173
      %v2182 = vunpack.c.h.b16 %v2173
      %v2183 = vunpack.c.l.b16 %v2174
      %v2184 = vunpack.c.h.b16 %v2174
      %v2185 = vunpack.c.l.b16 %v2175
      %v2186 = vunpack.c.h.b16 %v2175
      %v2187 = vunpack.c.l.b16 %v2176
      %v2188 = vunpack.c.h.b16 %v2176
      %v2189 = vpack.c.b16 %v2183, %v2181
      %v2190 = vpack.c.b16 %v2184, %v2182
      %v2191 = vpack.c.b16 %v2187, %v2185
      %v2192 = vpack.c.b16 %v2188, %v2186
      %vm2197 = vcmask 261120
      %v2199 = vsel %vm2197, %v2171, 0
      %v2202 = vsel %vm2197, %v2172, 0
      %2204 = vmatpush.bf16.msra.mxu0 0
      %2205 = vmatpush.bf16.msra.mxu0 0
      %2206 = vmatpush.bf16.msra.mxu0 0
      %2207 = vmatpush.bf16.msra.mxu0 0
      %2208 = vmatpush.bf16.msra.mxu0 0
      %2209 = vmatpush.bf16.msra.mxu0 0
      %2210 = vmatpush.bf16.msra.mxu0 %v2191
      %2211 = vmatpush.bf16.msra.mxu0 %v2189
      %2212 = vmatmul.bf16.gmra.mxu0 %v2199
      %v2213 = vpop.f32.mrf.mxu0
      %v2214 = vadd.f32 0.0, %v2213
      %v2215 = vpop.f32.mrf.mxu0
      %v2216 = vadd.f32 0.0, %v2215
      %2217 = vmatmul.bf16.gmra.mxu0 %v2202
      %v2218 = vpop.f32.mrf.mxu0
      %v2219 = vadd.f32 0.0, %v2218
      %v2220 = vpop.f32.mrf.mxu0
      %2221 = vdwg.mxu0
      %2222 = vmatpush.bf16.msra.mxu0 0
      %2223 = vmatpush.bf16.msra.mxu0 0
      %2224 = vmatpush.bf16.msra.mxu0 0
      %2225 = vmatpush.bf16.msra.mxu0 0
      %2226 = vmatpush.bf16.msra.mxu0 0
      %2227 = vmatpush.bf16.msra.mxu0 0
      %2228 = vmatpush.bf16.msra.mxu0 %v2192
      %2229 = vmatpush.bf16.msra.mxu0 %v2190
      %2230 = vmatmul.bf16.gmra.mxu0 %v2199
      %v2231 = vpop.f32.mrf.mxu0
      %v2232 = vadd.f32 0.0, %v2231
      %v2233 = vpop.f32.mrf.mxu0
      %v2234 = vadd.f32 0.0, %v2233
      %2235 = vmatmul.bf16.gmra.mxu0 %v2202
      %v2236 = vpop.f32.mrf.mxu0
      %v2237 = vadd.f32 0.0, %v2236
      %v2238 = vpop.f32.mrf.mxu0
      %2239 = vdwg.mxu0
      %vm2243 = vcmask 1046528
      %v2244 = vrot.slane %v2214, 1
      %v2245 = vrot.slane %v2216, 1
      %v2246 = vsel %vm2243, %v2244, %v2245
      %v2247 = vrot.slane %v2219, 1
      %v2248 = vsel %vm2243, %v2245, %v2247
      %2249 = vrot.lane.b32.xlu0 %v2246, 108
      %v2250 = vpop.permute.xlu0 %2249
      %2251 = vrot.lane.b32.xlu0 %v2248, 108
      %v2252 = vpop.permute.xlu0 %2251
      %v2255 = vadd.f32 %v2214, %v2250
      %v2256 = vadd.f32 %v2216, %v2252
      %v2257 = vrot.slane %v2214, 2
      %v2258 = vrot.slane %v2216, 2
      %v2259 = vsel %vm1990, %v2257, %v2258
      %v2260 = vrot.slane %v2219, 2
      %v2261 = vsel %vm1990, %v2258, %v2260
      %2262 = vrot.lane.b32.xlu0 %v2259, 88
      %v2263 = vpop.permute.xlu0 %2262
      %2264 = vrot.lane.b32.xlu0 %v2261, 88
      %v2265 = vpop.permute.xlu0 %2264
      %v2268 = vadd.f32 %v2255, %v2263
      %v2269 = vadd.f32 %v2256, %v2265
      %v2270 = vrot.slane %v2214, 3
      %v2271 = vrot.slane %v2216, 3
      %v2272 = vsel %vm2001, %v2270, %v2271
      %v2273 = vrot.slane %v2219, 3
      %v2274 = vsel %vm2001, %v2271, %v2273
      %2275 = vrot.lane.b32.xlu0 %v2272, 68
      %v2276 = vpop.permute.xlu0 %2275
      %2277 = vrot.lane.b32.xlu0 %v2274, 68
      %v2278 = vpop.permute.xlu0 %2277
      %v2281 = vadd.f32 %v2268, %v2276
      %v2282 = vadd.f32 %v2269, %v2278
      %v2283 = vrot.slane %v2214, 4
      %v2284 = vrot.slane %v2216, 4
      %v2285 = vsel %vm2028, %v2283, %v2284
      %v2286 = vrot.slane %v2219, 4
      %v2287 = vsel %vm2028, %v2284, %v2286
      %2288 = vrot.lane.b32.xlu0 %v2285, 48
      %v2289 = vpop.permute.xlu0 %2288
      %2290 = vrot.lane.b32.xlu0 %v2287, 48
      %v2291 = vpop.permute.xlu0 %2290
      %v2294 = vadd.f32 %v2281, %v2289
      %v2295 = vadd.f32 %v2282, %v2291
      %v2296 = vrot.slane %v2214, 5
      %v2297 = vrot.slane %v2216, 5
      %v2298 = vsel %vm2054, %v2296, %v2297
      %v2299 = vrot.slane %v2219, 5
      %v2300 = vsel %vm2054, %v2297, %v2299
      %2301 = vrot.lane.b32.xlu0 %v2298, 28
      %v2302 = vpop.permute.xlu0 %2301
      %2303 = vrot.lane.b32.xlu0 %v2300, 28
      %v2304 = vpop.permute.xlu0 %2303
      %v2307 = vadd.f32 %v2294, %v2302
      %v2308 = vadd.f32 %v2295, %v2304
      %v2312 = vrot.slane %v2214, 6
      %v2313 = vrot.slane %v2216, 6
      %v2314 = vsel %vm2083, %v2312, %v2313
      %v2315 = vrot.slane %v2232, 6
      %v2316 = vrot.slane %v2234, 6
      %v2317 = vsel %vm2083, %v2315, %v2316
      %v2318 = vrot.slane %v2219, 6
      %v2319 = vsel %vm2083, %v2313, %v2318
      %v2320 = vrot.slane %v2237, 6
      %v2321 = vsel %vm2083, %v2316, %v2320
      %2322 = vrot.lane.b32.xlu0 %v2314, 8
      %v2323 = vpop.permute.xlu0 %2322
      %2324 = vrot.lane.b32.xlu0 %v2317, 8
      %v2325 = vpop.permute.xlu0 %2324
      %2326 = vrot.lane.b32.xlu0 %v2319, 8
      %v2327 = vpop.permute.xlu0 %2326
      %2328 = vrot.lane.b32.xlu0 %v2321, 8
      %v2329 = vpop.permute.xlu0 %2328
      %vm2330 = vcmask 64512
      %v2331 = vsel %vm2330, %v2323, %v2325
      %v2332 = vsel %vm2330, %v2327, %v2329
      %v2335 = vadd.f32 %v2307, %v2331
      %v2336 = vadd.f32 %v2308, %v2332
      %v2337 = vld [vmem:[%s6] sm:$0x1]
      %v2339 = vperm.slane %v2337, 0
      %v2341 = vadd.f32 %v2335, %v2339
      %v2342 = vadd.f32 %v2336, %v2339
      %2343 = vxpose.xlu0.b32.start [1/16] %v2341, 128
      %2344 = vxpose.xlu0.b32.cont [2/16] %v2342, 128
      %2345 = vxpose.xlu0.b32.cont [3/16] 0.0, 128
      %2346 = vxpose.xlu0.b32.cont [4/16] 0.0, 128
      %2347 = vxpose.xlu0.b32.cont [5/16] 0.0, 128
      %2348 = vxpose.xlu0.b32.cont [6/16] 0.0, 128
      %2349 = vxpose.xlu0.b32.cont [7/16] 0.0, 128
      %2350 = vxpose.xlu0.b32.cont [8/16] 0.0, 128
      %2351 = vxpose.xlu0.b32.cont [9/16] 0.0, 128
      %2352 = vxpose.xlu0.b32.cont [10/16] 0.0, 128
      %2353 = vxpose.xlu0.b32.cont [11/16] 0.0, 128
      %2354 = vxpose.xlu0.b32.cont [12/16] 0.0, 128
      %2355 = vxpose.xlu0.b32.cont [13/16] 0.0, 128
      %2356 = vxpose.xlu0.b32.cont [14/16] 0.0, 128
      %2357 = vxpose.xlu0.b32.cont [15/16] 0.0, 128
      %2358 = vxpose.xlu0.b32.end [16/16] 0.0, 128
      %v2359 = vpop.trf.xlu0
      %v2360 = vpop.trf.xlu0
      %v2361 = vpop.trf.xlu0
      %v2362 = vpop.trf.xlu0
      %v2363 = vpop.trf.xlu0
      %v2364 = vpop.trf.xlu0
      %v2365 = vpop.trf.xlu0
      %v2366 = vpop.trf.xlu0
      %v2367 = vpop.trf.xlu0
      %v2368 = vpop.trf.xlu0
      %v2369 = vpop.trf.xlu0
      %v2370 = vpop.trf.xlu0
      %v2371 = vpop.trf.xlu0
      %v2372 = vpop.trf.xlu0
      %v2373 = vpop.trf.xlu0
      %v2374 = vpop.trf.xlu0
      %vm2375 = vcmask 130048
      %2376 = vst.msk [vmem:[%s441] sm:$0xff] %vm2375, %v2359
      %2377 = vst.msk [vmem:[%s441 + $0x8] sm:$0xff] %vm2375, %v2360
      %vm2378 = vcmask 125952
      %2379 = vst.msk [vmem:[%s441 + $0x10] sm:$0xf] %vm2378, %v2361
      %p2380 = scmp.lt.s32.totalorder %s22, 1
      %s2381 = scalar_select %p2380, %s22, 1
      %p2382 = scmp.lt.s32.totalorder %s23, 0
      %s2383 = scalar_select %p2382, %s23, 0
      %s2384 = smul.addr %s2381, 3
      %s2385 = sadd.s32 %s2383, %s2384
      %s2386 = smul.addr %s2385, 8
      %s2387 = scalar_lea.vmem %s7, %s2386
      // Predicated region
      $region49: #{tpu_custom_call.1} parent=47 // pred_check
        %p2388 = pneg %p234
      $region50: #{tpu_custom_call.1} parent=47 // pred_check_branch
        %2390 = sbr.rel (%p2388) target = $region52
      $region51: #{tpu_custom_call.1} parent=47 // pred_region
        _
      $region52: #{tpu_custom_call.1} parent=47 // pred_fallthru
        _
    $region48: #{tpu_custom_call.1} parent=5 // pred_fallthru
      _
    %p2391 = scmp.le.s32.totalorder 2, %s13
    // Predicated region
    $region53: #{tpu_custom_call.1} parent=5 // pred_check
      %p2392 = pneg %p2391
    $region54: #{tpu_custom_call.1} parent=5 // pred_check_branch
      %2394 = sbr.rel (%p2392) target = $region56
    $region55: #{tpu_custom_call.1} parent=5 // pred_region
      %s2395 = ssub.s32 %s13, 2
      // Predicated region
      $region57: #{tpu_custom_call.1} parent=55 // pred_check
        %p2396 = pneg %p240
      $region58: #{tpu_custom_call.1} parent=55 // pred_check_branch
        %2398 = sbr.rel (%p2396) target = $region60
      $region59: #{tpu_custom_call.1} parent=55 // pred_region
        %p2399 = scmp.lt.s32.totalorder %s24, 1
        %s2400 = scalar_select %p2399, %s24, 1
        %p2401 = scmp.lt.s32.totalorder %s25, 0
        %s2402 = scalar_select %p2401, %s25, 0
        %s2403 = smul.addr %s2400, 3
        %s2404 = sadd.s32 %s2402, %s2403
        %s2405 = smul.addr %s2404, 8
        %s2406 = scalar_lea.vmem %s7, %s2405
      $region60: #{tpu_custom_call.1} parent=55 // pred_fallthru
        _
    $region56: #{tpu_custom_call.1} parent=5 // pred_fallthru
      _
  $region6: #{tpu_custom_call.1} parent=0 // loop_footer
    %s17 = sadd.s32 1, %s13
  $region7: #{tpu_custom_call.1} parent=0 // loop_footer_branch
    %12 = sbr.rel target = $region3
  $region8: #{tpu_custom_call.1} parent=0 // loop_exit
    _

</llo_original>
